<compile_context>
chip_gen: v7x
topology: tpu7x:2x2x1
jax: 0.10.0
libtpu: 0.0.40
codegen_flags: <defaults>
</compile_context>

<pallas_src>
import functools

import jax
import jax.numpy as jnp
import numpy as np
from jax.experimental import pallas as pl
from jax.experimental.pallas import tpu as pltpu


# ---------------------------------------------------------------------------
# Pallas kernel: one block of `gb` graphs per grid step.
# ---------------------------------------------------------------------------
def mpnn_kernel(x_ref, adj_ref,
                in_w_ref, in_b_ref,
                msg_w_ref, msg_b_ref,
                upd_w_ref, upd_b_ref,
                out_ref, *scratch,
                feat_dim, use_block_diag):
    gb, m, f_aug = x_ref.shape       # graphs per block, padded max_nodes, feat+1
    s = in_w_ref.shape[1]            # state_dim
    rows = gb * m
    s_pad = out_ref.shape[1]
    num_rounds = msg_w_ref.shape[0]

    # input_net (shared weights): one big [gb*m, f+1] x [f+1, s] MXU matmul +
    # ReLU.  The appended mask feature column has a zero weight row, so it does
    # not perturb the result.  Padded rows pick up relu(bias) but never
    # propagate (zero adjacency rows/cols) and are masked out of the readout.
    x2d = x_ref[...].reshape(rows, f_aug)
    state = jnp.maximum(
        jnp.dot(x2d, in_w_ref[...], preferred_element_type=jnp.float32)
        + in_b_ref[...], 0.0)                                     # [rows, s] f32

    if use_block_diag:
        # Assemble the block-diagonal adjacency once per grid step so every
        # round's adj @ msg is a single large MXU matmul instead of gb tiny ones.
        bd_ref = scratch[0]                                       # [rows, rows] f32
        bd_ref[...] = jnp.zeros(bd_ref.shape, bd_ref.dtype)       # off-diag must be 0
        for g in range(gb):                                       # static unroll
            lo = g * m
            bd_ref[lo:lo + m, lo:lo + m] = adj_ref[g].astype(bd_ref.dtype)
        adj_f32 = None
    else:
        bd_ref = None
        adj_f32 = adj_ref[...].astype(jnp.float32)                # [gb, m, m]

    for r in range(num_rounds):      # static unroll (small round count)
        # message_net[r]: shared-weight Linear + ReLU over the whole block.
        msg = jnp.maximum(
            jnp.dot(state, msg_w_ref[r], preferred_element_type=jnp.float32)
            + msg_b_ref[r], 0.0)                                  # [rows, s]
        # weighted_messages = adj @ messages   (torch.bmm per graph).
        if use_block_diag:
            wm = jnp.dot(bd_ref[...], msg,
                         preferred_element_type=jnp.float32)      # [rows, s]
        else:
            wm = jnp.einsum("gij,gjs->gis", adj_f32, msg.reshape(gb, m, s),
                            preferred_element_type=jnp.float32).reshape(rows, s)
        # update_net[r]: shared-weight Linear + ReLU, residual add.
        upd = jnp.maximum(
            jnp.dot(wm, upd_w_ref[r], preferred_element_type=jnp.float32)
            + upd_b_ref[r], 0.0)
        state = state + upd

    # Masked per-graph readout.  The valid-node mask is the last feature
    # column of x (no separate mask stream).
    mask = x_ref[:, :, feat_dim:feat_dim + 1]                     # [gb, m, 1]
    readout = jnp.sum(state.reshape(gb, m, s) * mask, axis=1)     # [gb, s]

    # Lane-dense store: the out tile is padded to a multiple of 128 lanes so the
    # HBM writeback uses full-width rows; the wrapper slices [:, :s] afterwards.
    out_ref[:, :s] = readout
    if s_pad > s:
        out_ref[:, s:] = jnp.zeros((gb, s_pad - s), jnp.float32)


# ---------------------------------------------------------------------------
# Wrapper helpers.
# ---------------------------------------------------------------------------
def _round_up(a, b):
    return -(-a // b) * b


def _vmem_capacity_bytes():
    """Generation-aware VMEM capacity (128 MiB on v5e/v6e, 64 MiB/TC on v7x)."""
    try:
        info = pltpu.get_tpu_info()
        for name in ("vmem_capacity_bytes", "vmem_size_bytes", "vmem_bytes"):
            val = getattr(info, name, None)
            if val:
                return int(val)
    except Exception:
        pass
    return 64 << 20          # conservative fallback (v7x per-TensorCore)


def to_dense_batch_jax(x, batch, num_graphs, max_nodes):
    """JAX equivalent of torch_geometric.utils.to_dense_batch (batch sorted)."""
    n = x.shape[0]
    ones = jnp.ones((n,), jnp.int32)
    counts = jax.ops.segment_sum(ones, batch, num_segments=num_graphs)
    offsets = jnp.concatenate([jnp.zeros((1,), jnp.int32),
                               jnp.cumsum(counts)[:-1].astype(jnp.int32)])
    pos = jnp.arange(n, dtype=jnp.int32) - offsets[batch]
    x_dense = jnp.zeros((num_graphs, max_nodes, x.shape[1]), x.dtype).at[batch, pos].set(x)
    mask = jnp.zeros((num_graphs, max_nodes, 1), x.dtype).at[batch, pos].set(1.0)
    return x_dense, mask


# ---------------------------------------------------------------------------
# Forward wrapper: glue (to_dense_batch) in plain JAX, hot path in the kernel.
# ---------------------------------------------------------------------------
@functools.partial(jax.jit, static_argnames=("num_graphs", "graph_block",
                                             "adj_dtype", "use_block_diag"))
def gan_mpnn_forward(x, adjs, batch, params, *, num_graphs, graph_block=None,
                     adj_dtype=jnp.bfloat16, use_block_diag=None):
    num_g, max_nodes, _ = adjs.shape
    assert num_g == num_graphs
    feat_dim = x.shape[1]
    state_dim = params["in_w"].shape[1]
    num_rounds = params["msg_w"].shape[0]

    # Pad max_nodes to a multiple of 8 so in-kernel reshapes stay tile-aligned.
    mp = _round_up(max_nodes, 8)
    adj_itemsize = jnp.dtype(adj_dtype).itemsize

    # VMEM budget: explicit, generation-aware.  Remember every BlockSpec input
    # is double-buffered, so the adjacency tile budget is ~1/6 of the limit.
    vmem_cap = _vmem_capacity_bytes()
    vmem_limit = max(32 << 20, min((vmem_cap * 3) // 4, 96 << 20))
    adj_tile_cap = vmem_limit // 6

    BD_ROW_CAP = 1024          # block-diag scratch <= 1024^2 f32 = 4 MiB
    g_ceil = _round_up(num_graphs, 8)

    if graph_block is not None:
        gb = min(_round_up(max(1, int(graph_block)), 8), g_ceil)
        steps = -(-num_graphs // gb)
    else:
        gb = min(max(1, BD_ROW_CAP // mp),
                 max(1, adj_tile_cap // max(1, mp * mp * adj_itemsize)))
        gb = max(8, (gb // 8) * 8)
        if g_ceil <= gb:
            gb, steps = g_ceil, 1            # whole batch in a single grid step
        else:
            steps = -(-num_graphs // gb)
            if steps % 2:                    # even grid so v7x's 2 TCs both work
                steps += 1
                gb = _round_up(-(-num_graphs // steps), 8)
    g_pad = gb * steps
    rows = gb * mp
    use_bd = (rows <= BD_ROW_CAP) if use_block_diag is None else bool(use_block_diag)
    s_pad = _round_up(state_dim, 128)        # lane-dense output width

    # Dense-batch nodes directly at padded sizes (padded graphs/nodes all-zero),
    # and fold the valid-node mask into x as an extra zero-weight feature column.
    x_dense, mask = to_dense_batch_jax(x.astype(jnp.float32), batch, g_pad, mp)
    x_aug = jnp.concatenate([x_dense, mask], axis=-1)             # [Gp, mp, F+1]
    in_w_aug = jnp.concatenate(
        [params["in_w"].astype(jnp.float32),
         jnp.zeros((1, state_dim), jnp.float32)], axis=0)         # [F+1, S]

    # Adjacency padded to (g_pad, mp, mp); 0/1 values are exact in bfloat16,
    # which halves the dominant HBM stream and the VMEM tile.
    # PRECONDITION: padded rows/cols/graphs are exactly zero (set here).
    adjs_p = jnp.zeros((g_pad, mp, mp), adj_dtype)
    adjs_p = adjs_p.at[:num_graphs, :max_nodes, :max_nodes].set(adjs.astype(adj_dtype))

    kernel = functools.partial(mpnn_kernel, feat_dim=feat_dim, use_block_diag=use_bd)
    scratch = [pltpu.VMEM((rows, rows), jnp.float32)] if use_bd else []

    out = pl.pallas_call(
        kernel,
        out_shape=jax.ShapeDtypeStruct((g_pad, s_pad), jnp.float32),
        grid=(steps,),
        in_specs=[
            pl.BlockSpec((gb, mp, feat_dim + 1), lambda g: (g, 0, 0)),           # x (+mask)
            pl.BlockSpec((gb, mp, mp), lambda g: (g, 0, 0)),                     # adjacency
            pl.BlockSpec((feat_dim + 1, state_dim), lambda g: (0, 0)),           # in_w
            pl.BlockSpec((1, state_dim), lambda g: (0, 0)),                      # in_b
            pl.BlockSpec((num_rounds, state_dim, state_dim), lambda g: (0, 0, 0)),  # msg_w
            pl.BlockSpec((num_rounds, 1, state_dim), lambda g: (0, 0, 0)),          # msg_b
            pl.BlockSpec((num_rounds, state_dim, state_dim), lambda g: (0, 0, 0)),  # upd_w
            pl.BlockSpec((num_rounds, 1, state_dim), lambda g: (0, 0, 0)),          # upd_b
        ],
        out_specs=pl.BlockSpec((gb, s_pad), lambda g: (g, 0)),
        scratch_shapes=scratch,
        compiler_params=pltpu.CompilerParams(
            dimension_semantics=("parallel",),
            vmem_limit_bytes=int(vmem_limit)),
    )(x_aug, adjs_p,
      in_w_aug, params["in_b"].astype(jnp.float32),
      params["msg_w"].astype(jnp.float32), params["msg_b"].astype(jnp.float32),
      params["upd_w"].astype(jnp.float32), params["upd_b"].astype(jnp.float32))

    return out[:num_graphs, :state_dim]


# ---------------------------------------------------------------------------
# Pure-JAX reference (mirrors the PyTorch forward) for correctness check.
# ---------------------------------------------------------------------------
def gan_mpnn_reference(x, adjs, batch, params, num_graphs):
    max_nodes = adjs.shape[1]
    state = jnp.maximum(x @ params["in_w"] + params["in_b"], 0.0)
    state_dense, mask = to_dense_batch_jax(state, batch, num_graphs, max_nodes)
    state_exp = state_dense
    for r in range(params["msg_w"].shape[0]):
        msg = jnp.maximum(state_exp @ params["msg_w"][r] + params["msg_b"][r], 0.0)
        wm = jnp.einsum("gij,gjs->gis", adjs, msg)
        state_exp = state_exp + jnp.maximum(wm @ params["upd_w"][r] + params["upd_b"][r], 0.0)
    return jnp.sum(state_exp * mask, axis=1)  # [num_graphs, state_dim]


# ---------------------------------------------------------------------------
if __name__ == "__main__":
    # Module hyper-parameters.
    node_feature_dim = 8
    state_dim = 32
    num_rounds = 3

    # Graph batch: 16 small graphs (2..8 nodes each); dense max_nodes = 8.
    counts = np.array([5, 8, 3, 7, 6, 4, 8, 2, 5, 6, 7, 3, 8, 4, 5, 6], dtype=np.int32)
    num_graphs = int(counts.shape[0])
    max_nodes = int(counts.max())
    num_nodes = int(counts.sum())
    batch = jnp.asarray(np.repeat(np.arange(num_graphs), counts), dtype=jnp.int32)

    key = jax.random.PRNGKey(0)
    ks = jax.random.split(key, 12)

    # Deterministic parameter init (Linear weights stored as [in, out]).
    params = {
        "in_w": jax.random.normal(ks[0], (node_feature_dim, state_dim), jnp.float32)
                / np.sqrt(node_feature_dim),
        "in_b": jax.random.normal(ks[1], (1, state_dim), jnp.float32) * 0.1,
        "msg_w": jax.random.normal(ks[2], (num_rounds, state_dim, state_dim), jnp.float32)
                 / np.sqrt(state_dim),
        "msg_b": jax.random.normal(ks[3], (num_rounds, 1, state_dim), jnp.float32) * 0.1,
        "upd_w": jax.random.normal(ks[4], (num_rounds, state_dim, state_dim), jnp.float32)
                 / np.sqrt(state_dim),
        "upd_b": jax.random.normal(ks[5], (num_rounds, 1, state_dim), jnp.float32) * 0.1,
    }

    # Node features.
    x = jax.random.normal(ks[6], (num_nodes, node_feature_dim), jnp.float32)

    # Dense adjacency per graph (exactly zero in padded rows/cols — kernel precondition).
    rand_adj = (jax.random.uniform(ks[7], (num_graphs, max_nodes, max_nodes)) < 0.4
                ).astype(jnp.float32)
    node_valid = (jnp.arange(max_nodes)[None, :] < jnp.asarray(counts)[:, None]
                  ).astype(jnp.float32)                      # [G, M]
    adjs = rand_adj * node_valid[:, :, None] * node_valid[:, None, :]

    ref = gan_mpnn_reference(x, adjs, batch, params, num_graphs)

    # 1) Default heuristic: whole batch collapses to a single grid step,
    #    block-diagonal adjacency matmul path.
    out1 = jax.block_until_ready(
        gan_mpnn_forward(x, adjs, batch, params, num_graphs=num_graphs))
    np.testing.assert_allclose(np.asarray(out1), np.asarray(ref), rtol=1e-4, atol=1e-4)

    # 2) Forced graph_block=8 -> 2 (even) grid steps; exercises blocked index maps.
    out2 = jax.block_until_ready(
        gan_mpnn_forward(x, adjs, batch, params, num_graphs=num_graphs, graph_block=8))
    np.testing.assert_allclose(np.asarray(out2), np.asarray(ref), rtol=1e-4, atol=1e-4)

    # 3) Batched-einsum fallback path (used automatically when gb*max_nodes > 1024).
    out3 = jax.block_until_ready(
        gan_mpnn_forward(x, adjs, batch, params, num_graphs=num_graphs,
                         use_block_diag=False))
    np.testing.assert_allclose(np.asarray(out3), np.asarray(ref), rtol=1e-4, atol=1e-4)

    print("KERNEL_OK")
</pallas_src>

<mosaic_0001>
module attributes {stable_mosaic.version = 11 : i64} {
  func.func @mpnn_kernel(%arg0: i32, %arg1: memref<16x8x9xf32, #tpu.memory_space<vmem>>, %arg2: memref<16x8x8xbf16, #tpu.memory_space<vmem>>, %arg3: memref<9x32xf32, #tpu.memory_space<vmem>>, %arg4: memref<1x32xf32, #tpu.memory_space<vmem>>, %arg5: memref<3x32x32xf32, #tpu.memory_space<vmem>>, %arg6: memref<3x1x32xf32, #tpu.memory_space<vmem>>, %arg7: memref<3x32x32xf32, #tpu.memory_space<vmem>>, %arg8: memref<3x1x32xf32, #tpu.memory_space<vmem>>, %arg9: memref<16x128xf32, #tpu.memory_space<vmem>>, %arg10: memref<128x128xf32, #tpu.memory_space<vmem>>) attributes {dimension_semantics = [#tpu.dimension_semantics<parallel>], iteration_bounds = array<i64: 1>, scalar_prefetch = 0 : i64, scratch_operands = 1 : i64, tpu.core_type = #tpu.core_type<tc>, window_params = [{transform_indices = @transform_0, window_bounds = array<i64: 16, 8, 9>}, {transform_indices = @transform_1, window_bounds = array<i64: 16, 8, 8>}, {pipeline_mode = #tpu.pipeline_mode<synchronous>, transform_indices = @transform_2, window_bounds = array<i64: 9, 32>}, {pipeline_mode = #tpu.pipeline_mode<synchronous>, transform_indices = @transform_3, window_bounds = array<i64: 1, 32>}, {pipeline_mode = #tpu.pipeline_mode<synchronous>, transform_indices = @transform_4, window_bounds = array<i64: 3, 32, 32>}, {pipeline_mode = #tpu.pipeline_mode<synchronous>, transform_indices = @transform_5, window_bounds = array<i64: 3, 1, 32>}, {pipeline_mode = #tpu.pipeline_mode<synchronous>, transform_indices = @transform_6, window_bounds = array<i64: 3, 32, 32>}, {pipeline_mode = #tpu.pipeline_mode<synchronous>, transform_indices = @transform_7, window_bounds = array<i64: 3, 1, 32>}, {transform_indices = @transform_8, window_bounds = array<i64: 16, 128>}]} {
    %c0 = arith.constant 0 : index
    %c0_0 = arith.constant 0 : index
    %c0_1 = arith.constant 0 : index
    %0 = vector.load %arg1[%c0, %c0_0, %c0_1] : memref<16x8x9xf32, #tpu.memory_space<vmem>>, vector<16x8x9xf32>
    %1 = vector.shape_cast %0 : vector<16x8x9xf32> to vector<128x9xf32>
    %c0_2 = arith.constant 0 : index
    %c0_3 = arith.constant 0 : index
    %2 = vector.load %arg3[%c0_2, %c0_3] : memref<9x32xf32, #tpu.memory_space<vmem>>, vector<9x32xf32>
    %cst = arith.constant dense<0.000000e+00> : vector<128x32xf32>
    %3 = tpu.matmul %1, %2, %cst {dimension_numbers = #tpu.dot_dimension_numbers<[1], [0], [0], [1], [0, 0, 1, 1], [], []>} : vector<128x9xf32>, vector<9x32xf32>, vector<128x32xf32> -> vector<128x32xf32>
    %c0_4 = arith.constant 0 : index
    %c0_5 = arith.constant 0 : index
    %4 = vector.load %arg4[%c0_4, %c0_5] : memref<1x32xf32, #tpu.memory_space<vmem>>, vector<1x32xf32>
    %5 = vector.broadcast %4 : vector<1x32xf32> to vector<128x32xf32>
    %6 = arith.addf %3, %5 : vector<128x32xf32>
    %cst_6 = arith.constant 0.000000e+00 : f32
    %7 = vector.broadcast %cst_6 : f32 to vector<128x32xf32>
    %8 = arith.maximumf %6, %7 : vector<128x32xf32>
    %cst_7 = arith.constant 0.000000e+00 : f32
    %9 = vector.broadcast %cst_7 : f32 to vector<128x128xf32>
    %c0_8 = arith.constant 0 : index
    %c0_9 = arith.constant 0 : index
    %10 = vector.load %arg10[%c0_8, %c0_9] : memref<128x128xf32, #tpu.memory_space<vmem>>, vector<128x128xf32>
    tpu.vector_store %arg10[%c0_8, %c0_9], %9 {strides = array<i32>} : memref<128x128xf32, #tpu.memory_space<vmem>>, vector<128x128xf32>,
    %c0_10 = arith.constant 0 : index
    %c0_11 = arith.constant 0 : index
    %c0_12 = arith.constant 0 : index
    %11 = vector.load %arg2[%c0_10, %c0_11, %c0_12] : memref<16x8x8xbf16, #tpu.memory_space<vmem>>, vector<1x8x8xbf16>
    %12 = vector.shape_cast %11 : vector<1x8x8xbf16> to vector<8x8xbf16>
    %13 = arith.extf %12 : vector<8x8xbf16> to vector<8x8xf32>
    %c0_13 = arith.constant 0 : index
    %c0_14 = arith.constant 0 : index
    %14 = vector.load %arg10[%c0_13, %c0_14] : memref<128x128xf32, #tpu.memory_space<vmem>>, vector<8x8xf32>
    tpu.vector_store %arg10[%c0_13, %c0_14], %13 {strides = array<i32>} : memref<128x128xf32, #tpu.memory_space<vmem>>, vector<8x8xf32>,
    %c1 = arith.constant 1 : index
    %c0_15 = arith.constant 0 : index
    %c0_16 = arith.constant 0 : index
    %15 = vector.load %arg2[%c1, %c0_15, %c0_16] : memref<16x8x8xbf16, #tpu.memory_space<vmem>>, vector<1x8x8xbf16>
    %16 = vector.shape_cast %15 : vector<1x8x8xbf16> to vector<8x8xbf16>
    %17 = arith.extf %16 : vector<8x8xbf16> to vector<8x8xf32>
    %c8 = arith.constant 8 : index
    %c8_17 = arith.constant 8 : index
    %18 = vector.load %arg10[%c8, %c8_17] : memref<128x128xf32, #tpu.memory_space<vmem>>, vector<8x8xf32>
    tpu.vector_store %arg10[%c8, %c8_17], %17 {strides = array<i32>} : memref<128x128xf32, #tpu.memory_space<vmem>>, vector<8x8xf32>,
    %c2 = arith.constant 2 : index
    %c0_18 = arith.constant 0 : index
    %c0_19 = arith.constant 0 : index
    %19 = vector.load %arg2[%c2, %c0_18, %c0_19] : memref<16x8x8xbf16, #tpu.memory_space<vmem>>, vector<1x8x8xbf16>
    %20 = vector.shape_cast %19 : vector<1x8x8xbf16> to vector<8x8xbf16>
    %21 = arith.extf %20 : vector<8x8xbf16> to vector<8x8xf32>
    %c16 = arith.constant 16 : index
    %c16_20 = arith.constant 16 : index
    %22 = vector.load %arg10[%c16, %c16_20] : memref<128x128xf32, #tpu.memory_space<vmem>>, vector<8x8xf32>
    tpu.vector_store %arg10[%c16, %c16_20], %21 {strides = array<i32>} : memref<128x128xf32, #tpu.memory_space<vmem>>, vector<8x8xf32>,
    %c3 = arith.constant 3 : index
    %c0_21 = arith.constant 0 : index
    %c0_22 = arith.constant 0 : index
    %23 = vector.load %arg2[%c3, %c0_21, %c0_22] : memref<16x8x8xbf16, #tpu.memory_space<vmem>>, vector<1x8x8xbf16>
    %24 = vector.shape_cast %23 : vector<1x8x8xbf16> to vector<8x8xbf16>
    %25 = arith.extf %24 : vector<8x8xbf16> to vector<8x8xf32>
    %c24 = arith.constant 24 : index
    %c24_23 = arith.constant 24 : index
    %26 = vector.load %arg10[%c24, %c24_23] : memref<128x128xf32, #tpu.memory_space<vmem>>, vector<8x8xf32>
    tpu.vector_store %arg10[%c24, %c24_23], %25 {strides = array<i32>} : memref<128x128xf32, #tpu.memory_space<vmem>>, vector<8x8xf32>,
    %c4 = arith.constant 4 : index
    %c0_24 = arith.constant 0 : index
    %c0_25 = arith.constant 0 : index
    %27 = vector.load %arg2[%c4, %c0_24, %c0_25] : memref<16x8x8xbf16, #tpu.memory_space<vmem>>, vector<1x8x8xbf16>
    %28 = vector.shape_cast %27 : vector<1x8x8xbf16> to vector<8x8xbf16>
    %29 = arith.extf %28 : vector<8x8xbf16> to vector<8x8xf32>
    %c32 = arith.constant 32 : index
    %c32_26 = arith.constant 32 : index
    %30 = vector.load %arg10[%c32, %c32_26] : memref<128x128xf32, #tpu.memory_space<vmem>>, vector<8x8xf32>
    tpu.vector_store %arg10[%c32, %c32_26], %29 {strides = array<i32>} : memref<128x128xf32, #tpu.memory_space<vmem>>, vector<8x8xf32>,
    %c5 = arith.constant 5 : index
    %c0_27 = arith.constant 0 : index
    %c0_28 = arith.constant 0 : index
    %31 = vector.load %arg2[%c5, %c0_27, %c0_28] : memref<16x8x8xbf16, #tpu.memory_space<vmem>>, vector<1x8x8xbf16>
    %32 = vector.shape_cast %31 : vector<1x8x8xbf16> to vector<8x8xbf16>
    %33 = arith.extf %32 : vector<8x8xbf16> to vector<8x8xf32>
    %c40 = arith.constant 40 : index
    %c40_29 = arith.constant 40 : index
    %34 = vector.load %arg10[%c40, %c40_29] : memref<128x128xf32, #tpu.memory_space<vmem>>, vector<8x8xf32>
    tpu.vector_store %arg10[%c40, %c40_29], %33 {strides = array<i32>} : memref<128x128xf32, #tpu.memory_space<vmem>>, vector<8x8xf32>,
    %c6 = arith.constant 6 : index
    %c0_30 = arith.constant 0 : index
    %c0_31 = arith.constant 0 : index
    %35 = vector.load %arg2[%c6, %c0_30, %c0_31] : memref<16x8x8xbf16, #tpu.memory_space<vmem>>, vector<1x8x8xbf16>
    %36 = vector.shape_cast %35 : vector<1x8x8xbf16> to vector<8x8xbf16>
    %37 = arith.extf %36 : vector<8x8xbf16> to vector<8x8xf32>
    %c48 = arith.constant 48 : index
    %c48_32 = arith.constant 48 : index
    %38 = vector.load %arg10[%c48, %c48_32] : memref<128x128xf32, #tpu.memory_space<vmem>>, vector<8x8xf32>
    tpu.vector_store %arg10[%c48, %c48_32], %37 {strides = array<i32>} : memref<128x128xf32, #tpu.memory_space<vmem>>, vector<8x8xf32>,
    %c7 = arith.constant 7 : index
    %c0_33 = arith.constant 0 : index
    %c0_34 = arith.constant 0 : index
    %39 = vector.load %arg2[%c7, %c0_33, %c0_34] : memref<16x8x8xbf16, #tpu.memory_space<vmem>>, vector<1x8x8xbf16>
    %40 = vector.shape_cast %39 : vector<1x8x8xbf16> to vector<8x8xbf16>
    %41 = arith.extf %40 : vector<8x8xbf16> to vector<8x8xf32>
    %c56 = arith.constant 56 : index
    %c56_35 = arith.constant 56 : index
    %42 = vector.load %arg10[%c56, %c56_35] : memref<128x128xf32, #tpu.memory_space<vmem>>, vector<8x8xf32>
    tpu.vector_store %arg10[%c56, %c56_35], %41 {strides = array<i32>} : memref<128x128xf32, #tpu.memory_space<vmem>>, vector<8x8xf32>,
    %c8_36 = arith.constant 8 : index
    %c0_37 = arith.constant 0 : index
    %c0_38 = arith.constant 0 : index
    %43 = vector.load %arg2[%c8_36, %c0_37, %c0_38] : memref<16x8x8xbf16, #tpu.memory_space<vmem>>, vector<1x8x8xbf16>
    %44 = vector.shape_cast %43 : vector<1x8x8xbf16> to vector<8x8xbf16>
    %45 = arith.extf %44 : vector<8x8xbf16> to vector<8x8xf32>
    %c64 = arith.constant 64 : index
    %c64_39 = arith.constant 64 : index
    %46 = vector.load %arg10[%c64, %c64_39] : memref<128x128xf32, #tpu.memory_space<vmem>>, vector<8x8xf32>
    tpu.vector_store %arg10[%c64, %c64_39], %45 {strides = array<i32>} : memref<128x128xf32, #tpu.memory_space<vmem>>, vector<8x8xf32>,
    %c9 = arith.constant 9 : index
    %c0_40 = arith.constant 0 : index
    %c0_41 = arith.constant 0 : index
    %47 = vector.load %arg2[%c9, %c0_40, %c0_41] : memref<16x8x8xbf16, #tpu.memory_space<vmem>>, vector<1x8x8xbf16>
    %48 = vector.shape_cast %47 : vector<1x8x8xbf16> to vector<8x8xbf16>
    %49 = arith.extf %48 : vector<8x8xbf16> to vector<8x8xf32>
    %c72 = arith.constant 72 : index
    %c72_42 = arith.constant 72 : index
    %50 = vector.load %arg10[%c72, %c72_42] : memref<128x128xf32, #tpu.memory_space<vmem>>, vector<8x8xf32>
    tpu.vector_store %arg10[%c72, %c72_42], %49 {strides = array<i32>} : memref<128x128xf32, #tpu.memory_space<vmem>>, vector<8x8xf32>,
    %c10 = arith.constant 10 : index
    %c0_43 = arith.constant 0 : index
    %c0_44 = arith.constant 0 : index
    %51 = vector.load %arg2[%c10, %c0_43, %c0_44] : memref<16x8x8xbf16, #tpu.memory_space<vmem>>, vector<1x8x8xbf16>
    %52 = vector.shape_cast %51 : vector<1x8x8xbf16> to vector<8x8xbf16>
    %53 = arith.extf %52 : vector<8x8xbf16> to vector<8x8xf32>
    %c80 = arith.constant 80 : index
    %c80_45 = arith.constant 80 : index
    %54 = vector.load %arg10[%c80, %c80_45] : memref<128x128xf32, #tpu.memory_space<vmem>>, vector<8x8xf32>
    tpu.vector_store %arg10[%c80, %c80_45], %53 {strides = array<i32>} : memref<128x128xf32, #tpu.memory_space<vmem>>, vector<8x8xf32>,
    %c11 = arith.constant 11 : index
    %c0_46 = arith.constant 0 : index
    %c0_47 = arith.constant 0 : index
    %55 = vector.load %arg2[%c11, %c0_46, %c0_47] : memref<16x8x8xbf16, #tpu.memory_space<vmem>>, vector<1x8x8xbf16>
    %56 = vector.shape_cast %55 : vector<1x8x8xbf16> to vector<8x8xbf16>
    %57 = arith.extf %56 : vector<8x8xbf16> to vector<8x8xf32>
    %c88 = arith.constant 88 : index
    %c88_48 = arith.constant 88 : index
    %58 = vector.load %arg10[%c88, %c88_48] : memref<128x128xf32, #tpu.memory_space<vmem>>, vector<8x8xf32>
    tpu.vector_store %arg10[%c88, %c88_48], %57 {strides = array<i32>} : memref<128x128xf32, #tpu.memory_space<vmem>>, vector<8x8xf32>,
    %c12 = arith.constant 12 : index
    %c0_49 = arith.constant 0 : index
    %c0_50 = arith.constant 0 : index
    %59 = vector.load %arg2[%c12, %c0_49, %c0_50] : memref<16x8x8xbf16, #tpu.memory_space<vmem>>, vector<1x8x8xbf16>
    %60 = vector.shape_cast %59 : vector<1x8x8xbf16> to vector<8x8xbf16>
    %61 = arith.extf %60 : vector<8x8xbf16> to vector<8x8xf32>
    %c96 = arith.constant 96 : index
    %c96_51 = arith.constant 96 : index
    %62 = vector.load %arg10[%c96, %c96_51] : memref<128x128xf32, #tpu.memory_space<vmem>>, vector<8x8xf32>
    tpu.vector_store %arg10[%c96, %c96_51], %61 {strides = array<i32>} : memref<128x128xf32, #tpu.memory_space<vmem>>, vector<8x8xf32>,
    %c13 = arith.constant 13 : index
    %c0_52 = arith.constant 0 : index
    %c0_53 = arith.constant 0 : index
    %63 = vector.load %arg2[%c13, %c0_52, %c0_53] : memref<16x8x8xbf16, #tpu.memory_space<vmem>>, vector<1x8x8xbf16>
    %64 = vector.shape_cast %63 : vector<1x8x8xbf16> to vector<8x8xbf16>
    %65 = arith.extf %64 : vector<8x8xbf16> to vector<8x8xf32>
    %c104 = arith.constant 104 : index
    %c104_54 = arith.constant 104 : index
    %66 = vector.load %arg10[%c104, %c104_54] : memref<128x128xf32, #tpu.memory_space<vmem>>, vector<8x8xf32>
    tpu.vector_store %arg10[%c104, %c104_54], %65 {strides = array<i32>} : memref<128x128xf32, #tpu.memory_space<vmem>>, vector<8x8xf32>,
    %c14 = arith.constant 14 : index
    %c0_55 = arith.constant 0 : index
    %c0_56 = arith.constant 0 : index
    %67 = vector.load %arg2[%c14, %c0_55, %c0_56] : memref<16x8x8xbf16, #tpu.memory_space<vmem>>, vector<1x8x8xbf16>
    %68 = vector.shape_cast %67 : vector<1x8x8xbf16> to vector<8x8xbf16>
    %69 = arith.extf %68 : vector<8x8xbf16> to vector<8x8xf32>
    %c112 = arith.constant 112 : index
    %c112_57 = arith.constant 112 : index
    %70 = vector.load %arg10[%c112, %c112_57] : memref<128x128xf32, #tpu.memory_space<vmem>>, vector<8x8xf32>
    tpu.vector_store %arg10[%c112, %c112_57], %69 {strides = array<i32>} : memref<128x128xf32, #tpu.memory_space<vmem>>, vector<8x8xf32>,
    %c15 = arith.constant 15 : index
    %c0_58 = arith.constant 0 : index
    %c0_59 = arith.constant 0 : index
    %71 = vector.load %arg2[%c15, %c0_58, %c0_59] : memref<16x8x8xbf16, #tpu.memory_space<vmem>>, vector<1x8x8xbf16>
    %72 = vector.shape_cast %71 : vector<1x8x8xbf16> to vector<8x8xbf16>
    %73 = arith.extf %72 : vector<8x8xbf16> to vector<8x8xf32>
    %c120 = arith.constant 120 : index
    %c120_60 = arith.constant 120 : index
    %74 = vector.load %arg10[%c120, %c120_60] : memref<128x128xf32, #tpu.memory_space<vmem>>, vector<8x8xf32>
    tpu.vector_store %arg10[%c120, %c120_60], %73 {strides = array<i32>} : memref<128x128xf32, #tpu.memory_space<vmem>>, vector<8x8xf32>,
    %c0_61 = arith.constant 0 : index
    %c0_62 = arith.constant 0 : index
    %c0_63 = arith.constant 0 : index
    %75 = vector.load %arg5[%c0_61, %c0_62, %c0_63] : memref<3x32x32xf32, #tpu.memory_space<vmem>>, vector<1x32x32xf32>
    %76 = vector.shape_cast %75 : vector<1x32x32xf32> to vector<32x32xf32>
    %cst_64 = arith.constant dense<0.000000e+00> : vector<128x32xf32>
    %77 = tpu.matmul %8, %76, %cst_64 {dimension_numbers = #tpu.dot_dimension_numbers<[1], [0], [0], [1], [0, 0, 1, 1], [], []>} : vector<128x32xf32>, vector<32x32xf32>, vector<128x32xf32> -> vector<128x32xf32>
    %c0_65 = arith.constant 0 : index
    %c0_66 = arith.constant 0 : index
    %c0_67 = arith.constant 0 : index
    %78 = vector.load %arg6[%c0_65, %c0_66, %c0_67] : memref<3x1x32xf32, #tpu.memory_space<vmem>>, vector<1x1x32xf32>
    %79 = vector.shape_cast %78 : vector<1x1x32xf32> to vector<1x32xf32>
    %80 = vector.broadcast %79 : vector<1x32xf32> to vector<128x32xf32>
    %81 = arith.addf %77, %80 : vector<128x32xf32>
    %cst_68 = arith.constant 0.000000e+00 : f32
    %82 = vector.broadcast %cst_68 : f32 to vector<128x32xf32>
    %83 = arith.maximumf %81, %82 : vector<128x32xf32>
    %c0_69 = arith.constant 0 : index
    %c0_70 = arith.constant 0 : index
    %84 = vector.load %arg10[%c0_69, %c0_70] : memref<128x128xf32, #tpu.memory_space<vmem>>, vector<128x128xf32>
    %cst_71 = arith.constant dense<0.000000e+00> : vector<128x32xf32>
    %85 = tpu.matmul %84, %83, %cst_71 {dimension_numbers = #tpu.dot_dimension_numbers<[1], [0], [0], [1], [0, 0, 1, 1], [], []>} : vector<128x128xf32>, vector<128x32xf32>, vector<128x32xf32> -> vector<128x32xf32>
    %c0_72 = arith.constant 0 : index
    %c0_73 = arith.constant 0 : index
    %c0_74 = arith.constant 0 : index
    %86 = vector.load %arg7[%c0_72, %c0_73, %c0_74] : memref<3x32x32xf32, #tpu.memory_space<vmem>>, vector<1x32x32xf32>
    %87 = vector.shape_cast %86 : vector<1x32x32xf32> to vector<32x32xf32>
    %cst_75 = arith.constant dense<0.000000e+00> : vector<128x32xf32>
    %88 = tpu.matmul %85, %87, %cst_75 {dimension_numbers = #tpu.dot_dimension_numbers<[1], [0], [0], [1], [0, 0, 1, 1], [], []>} : vector<128x32xf32>, vector<32x32xf32>, vector<128x32xf32> -> vector<128x32xf32>
    %c0_76 = arith.constant 0 : index
    %c0_77 = arith.constant 0 : index
    %c0_78 = arith.constant 0 : index
    %89 = vector.load %arg8[%c0_76, %c0_77, %c0_78] : memref<3x1x32xf32, #tpu.memory_space<vmem>>, vector<1x1x32xf32>
    %90 = vector.shape_cast %89 : vector<1x1x32xf32> to vector<1x32xf32>
    %91 = vector.broadcast %90 : vector<1x32xf32> to vector<128x32xf32>
    %92 = arith.addf %88, %91 : vector<128x32xf32>
    %cst_79 = arith.constant 0.000000e+00 : f32
    %93 = vector.broadcast %cst_79 : f32 to vector<128x32xf32>
    %94 = arith.maximumf %92, %93 : vector<128x32xf32>
    %95 = arith.addf %8, %94 : vector<128x32xf32>
    %c1_80 = arith.constant 1 : index
    %c0_81 = arith.constant 0 : index
    %c0_82 = arith.constant 0 : index
    %96 = vector.load %arg5[%c1_80, %c0_81, %c0_82] : memref<3x32x32xf32, #tpu.memory_space<vmem>>, vector<1x32x32xf32>
    %97 = vector.shape_cast %96 : vector<1x32x32xf32> to vector<32x32xf32>
    %cst_83 = arith.constant dense<0.000000e+00> : vector<128x32xf32>
    %98 = tpu.matmul %95, %97, %cst_83 {dimension_numbers = #tpu.dot_dimension_numbers<[1], [0], [0], [1], [0, 0, 1, 1], [], []>} : vector<128x32xf32>, vector<32x32xf32>, vector<128x32xf32> -> vector<128x32xf32>
    %c1_84 = arith.constant 1 : index
    %c0_85 = arith.constant 0 : index
    %c0_86 = arith.constant 0 : index
    %99 = vector.load %arg6[%c1_84, %c0_85, %c0_86] : memref<3x1x32xf32, #tpu.memory_space<vmem>>, vector<1x1x32xf32>
    %100 = vector.shape_cast %99 : vector<1x1x32xf32> to vector<1x32xf32>
    %101 = vector.broadcast %100 : vector<1x32xf32> to vector<128x32xf32>
    %102 = arith.addf %98, %101 : vector<128x32xf32>
    %cst_87 = arith.constant 0.000000e+00 : f32
    %103 = vector.broadcast %cst_87 : f32 to vector<128x32xf32>
    %104 = arith.maximumf %102, %103 : vector<128x32xf32>
    %c0_88 = arith.constant 0 : index
    %c0_89 = arith.constant 0 : index
    %105 = vector.load %arg10[%c0_88, %c0_89] : memref<128x128xf32, #tpu.memory_space<vmem>>, vector<128x128xf32>
    %cst_90 = arith.constant dense<0.000000e+00> : vector<128x32xf32>
    %106 = tpu.matmul %105, %104, %cst_90 {dimension_numbers = #tpu.dot_dimension_numbers<[1], [0], [0], [1], [0, 0, 1, 1], [], []>} : vector<128x128xf32>, vector<128x32xf32>, vector<128x32xf32> -> vector<128x32xf32>
    %c1_91 = arith.constant 1 : index
    %c0_92 = arith.constant 0 : index
    %c0_93 = arith.constant 0 : index
    %107 = vector.load %arg7[%c1_91, %c0_92, %c0_93] : memref<3x32x32xf32, #tpu.memory_space<vmem>>, vector<1x32x32xf32>
    %108 = vector.shape_cast %107 : vector<1x32x32xf32> to vector<32x32xf32>
    %cst_94 = arith.constant dense<0.000000e+00> : vector<128x32xf32>
    %109 = tpu.matmul %106, %108, %cst_94 {dimension_numbers = #tpu.dot_dimension_numbers<[1], [0], [0], [1], [0, 0, 1, 1], [], []>} : vector<128x32xf32>, vector<32x32xf32>, vector<128x32xf32> -> vector<128x32xf32>
    %c1_95 = arith.constant 1 : index
    %c0_96 = arith.constant 0 : index
    %c0_97 = arith.constant 0 : index
    %110 = vector.load %arg8[%c1_95, %c0_96, %c0_97] : memref<3x1x32xf32, #tpu.memory_space<vmem>>, vector<1x1x32xf32>
    %111 = vector.shape_cast %110 : vector<1x1x32xf32> to vector<1x32xf32>
    %112 = vector.broadcast %111 : vector<1x32xf32> to vector<128x32xf32>
    %113 = arith.addf %109, %112 : vector<128x32xf32>
    %cst_98 = arith.constant 0.000000e+00 : f32
    %114 = vector.broadcast %cst_98 : f32 to vector<128x32xf32>
    %115 = arith.maximumf %113, %114 : vector<128x32xf32>
    %116 = arith.addf %95, %115 : vector<128x32xf32>
    %c2_99 = arith.constant 2 : index
    %c0_100 = arith.constant 0 : index
    %c0_101 = arith.constant 0 : index
    %117 = vector.load %arg5[%c2_99, %c0_100, %c0_101] : memref<3x32x32xf32, #tpu.memory_space<vmem>>, vector<1x32x32xf32>
    %118 = vector.shape_cast %117 : vector<1x32x32xf32> to vector<32x32xf32>
    %cst_102 = arith.constant dense<0.000000e+00> : vector<128x32xf32>
    %119 = tpu.matmul %116, %118, %cst_102 {dimension_numbers = #tpu.dot_dimension_numbers<[1], [0], [0], [1], [0, 0, 1, 1], [], []>} : vector<128x32xf32>, vector<32x32xf32>, vector<128x32xf32> -> vector<128x32xf32>
    %c2_103 = arith.constant 2 : index
    %c0_104 = arith.constant 0 : index
    %c0_105 = arith.constant 0 : index
    %120 = vector.load %arg6[%c2_103, %c0_104, %c0_105] : memref<3x1x32xf32, #tpu.memory_space<vmem>>, vector<1x1x32xf32>
    %121 = vector.shape_cast %120 : vector<1x1x32xf32> to vector<1x32xf32>
    %122 = vector.broadcast %121 : vector<1x32xf32> to vector<128x32xf32>
    %123 = arith.addf %119, %122 : vector<128x32xf32>
    %cst_106 = arith.constant 0.000000e+00 : f32
    %124 = vector.broadcast %cst_106 : f32 to vector<128x32xf32>
    %125 = arith.maximumf %123, %124 : vector<128x32xf32>
    %c0_107 = arith.constant 0 : index
    %c0_108 = arith.constant 0 : index
    %126 = vector.load %arg10[%c0_107, %c0_108] : memref<128x128xf32, #tpu.memory_space<vmem>>, vector<128x128xf32>
    %cst_109 = arith.constant dense<0.000000e+00> : vector<128x32xf32>
    %127 = tpu.matmul %126, %125, %cst_109 {dimension_numbers = #tpu.dot_dimension_numbers<[1], [0], [0], [1], [0, 0, 1, 1], [], []>} : vector<128x128xf32>, vector<128x32xf32>, vector<128x32xf32> -> vector<128x32xf32>
    %c2_110 = arith.constant 2 : index
    %c0_111 = arith.constant 0 : index
    %c0_112 = arith.constant 0 : index
    %128 = vector.load %arg7[%c2_110, %c0_111, %c0_112] : memref<3x32x32xf32, #tpu.memory_space<vmem>>, vector<1x32x32xf32>
    %129 = vector.shape_cast %128 : vector<1x32x32xf32> to vector<32x32xf32>
    %cst_113 = arith.constant dense<0.000000e+00> : vector<128x32xf32>
    %130 = tpu.matmul %127, %129, %cst_113 {dimension_numbers = #tpu.dot_dimension_numbers<[1], [0], [0], [1], [0, 0, 1, 1], [], []>} : vector<128x32xf32>, vector<32x32xf32>, vector<128x32xf32> -> vector<128x32xf32>
    %c2_114 = arith.constant 2 : index
    %c0_115 = arith.constant 0 : index
    %c0_116 = arith.constant 0 : index
    %131 = vector.load %arg8[%c2_114, %c0_115, %c0_116] : memref<3x1x32xf32, #tpu.memory_space<vmem>>, vector<1x1x32xf32>
    %132 = vector.shape_cast %131 : vector<1x1x32xf32> to vector<1x32xf32>
    %133 = vector.broadcast %132 : vector<1x32xf32> to vector<128x32xf32>
    %134 = arith.addf %130, %133 : vector<128x32xf32>
    %cst_117 = arith.constant 0.000000e+00 : f32
    %135 = vector.broadcast %cst_117 : f32 to vector<128x32xf32>
    %136 = arith.maximumf %134, %135 : vector<128x32xf32>
    %137 = arith.addf %116, %136 : vector<128x32xf32>
    %c0_118 = arith.constant 0 : index
    %c0_119 = arith.constant 0 : index
    %c8_120 = arith.constant 8 : index
    %138 = vector.load %arg1[%c0_118, %c0_119, %c8_120] : memref<16x8x9xf32, #tpu.memory_space<vmem>>, vector<16x8x1xf32>
    %139 = vector.shape_cast %137 : vector<128x32xf32> to vector<16x8x32xf32>
    %140 = vector.broadcast %138 : vector<16x8x1xf32> to vector<16x8x32xf32>
    %141 = arith.mulf %139, %140 : vector<16x8x32xf32>
    %cst_121 = arith.constant dense<0.000000e+00> : vector<16x32xf32>
    %142 = vector.multi_reduction <add>, %141, %cst_121 [1] : vector<16x8x32xf32> to vector<16x32xf32>
    %c0_122 = arith.constant 0 : index
    %c0_123 = arith.constant 0 : index
    %143 = vector.load %arg9[%c0_122, %c0_123] : memref<16x128xf32, #tpu.memory_space<vmem>>, vector<16x32xf32>
    tpu.vector_store %arg9[%c0_122, %c0_123], %142 {strides = array<i32>} : memref<16x128xf32, #tpu.memory_space<vmem>>, vector<16x32xf32>,
    %cst_124 = arith.constant 0.000000e+00 : f32
    %144 = vector.broadcast %cst_124 : f32 to vector<16x96xf32>
    %c0_125 = arith.constant 0 : index
    %c32_126 = arith.constant 32 : index
    %145 = vector.load %arg9[%c0_125, %c32_126] : memref<16x128xf32, #tpu.memory_space<vmem>>, vector<16x96xf32>
    tpu.vector_store %arg9[%c0_125, %c32_126], %144 {strides = array<i32>} : memref<16x128xf32, #tpu.memory_space<vmem>>, vector<16x96xf32>,
    return
  }
  func.func @transform_0(%arg0: i32) -> (i32, i32, i32) {
    %c0_i32 = arith.constant 0 : i32
    %c0_i32_0 = arith.constant 0 : i32
    %c0_i32_1 = arith.constant 0 : i32
    return %arg0, %c0_i32, %c0_i32_0 : i32, i32, i32
  }
  func.func @transform_1(%arg0: i32) -> (i32, i32, i32) {
    %c0_i32 = arith.constant 0 : i32
    %c0_i32_0 = arith.constant 0 : i32
    %c0_i32_1 = arith.constant 0 : i32
    return %arg0, %c0_i32, %c0_i32_0 : i32, i32, i32
  }
  func.func @transform_2(%arg0: i32) -> (i32, i32) {
    %c0_i32 = arith.constant 0 : i32
    %c0_i32_0 = arith.constant 0 : i32
    %c0_i32_1 = arith.constant 0 : i32
    return %c0_i32, %c0_i32_0 : i32, i32
  }
  func.func @transform_3(%arg0: i32) -> (i32, i32) {
    %c0_i32 = arith.constant 0 : i32
    %c0_i32_0 = arith.constant 0 : i32
    %c0_i32_1 = arith.constant 0 : i32
    return %c0_i32, %c0_i32_0 : i32, i32
  }
  func.func @transform_4(%arg0: i32) -> (i32, i32, i32) {
    %c0_i32 = arith.constant 0 : i32
    %c0_i32_0 = arith.constant 0 : i32
    %c0_i32_1 = arith.constant 0 : i32
    %c0_i32_2 = arith.constant 0 : i32
    return %c0_i32, %c0_i32_0, %c0_i32_1 : i32, i32, i32
  }
  func.func @transform_5(%arg0: i32) -> (i32, i32, i32) {
    %c0_i32 = arith.constant 0 : i32
    %c0_i32_0 = arith.constant 0 : i32
    %c0_i32_1 = arith.constant 0 : i32
    %c0_i32_2 = arith.constant 0 : i32
    return %c0_i32, %c0_i32_0, %c0_i32_1 : i32, i32, i32
  }
  func.func @transform_6(%arg0: i32) -> (i32, i32, i32) {
    %c0_i32 = arith.constant 0 : i32
    %c0_i32_0 = arith.constant 0 : i32
    %c0_i32_1 = arith.constant 0 : i32
    %c0_i32_2 = arith.constant 0 : i32
    return %c0_i32, %c0_i32_0, %c0_i32_1 : i32, i32, i32
  }
  func.func @transform_7(%arg0: i32) -> (i32, i32, i32) {
    %c0_i32 = arith.constant 0 : i32
    %c0_i32_0 = arith.constant 0 : i32
    %c0_i32_1 = arith.constant 0 : i32
    %c0_i32_2 = arith.constant 0 : i32
    return %c0_i32, %c0_i32_0, %c0_i32_1 : i32, i32, i32
  }
  func.func @transform_8(%arg0: i32) -> (i32, i32) {
    %c0_i32 = arith.constant 0 : i32
    %c0_i32_0 = arith.constant 0 : i32
    return %arg0, %c0_i32 : i32, i32
  }
}

</mosaic_0001>

<llo_original>
// kernel: gan_mpnn_forward.1
$region0: #{gan_mpnn_forward.1}
  #allocation0 [shape = 'u32[]', space=smem, size = 0x4, offset = 0x4, fixed_abs, tag = 'smem constant byte address 0x4 - core index']
  #allocation1 [shape = 'u32[144,128]{1,0:T(1,128)}', space=vmem, size = 0x12000, scoped, tag = 'internal scratch']
  #allocation2 [shape = 'f32[128,128]{1,0:T(8,128)}', space=vmem, size = 0x10000, scoped, tag = 'scratch operand']
  %s0 = inlined_call_operand.vmem [shape: f32[16,8,9], index: 0, kind: input, shape index: {}]
  %s1 = inlined_call_operand.vmem [shape: bf16[16,8,8], index: 1, kind: input, shape index: {}]
  %s2 = inlined_call_operand.vmem [shape: f32[9,32], index: 2, kind: input, shape index: {}]
  %s3 = inlined_call_operand.vmem [shape: f32[1,32], index: 3, kind: input, shape index: {}]
  %s4 = inlined_call_operand.vmem [shape: f32[3,32,32], index: 4, kind: input, shape index: {}]
  %s5 = inlined_call_operand.vmem [shape: f32[3,1,32], index: 5, kind: input, shape index: {}]
  %s6 = inlined_call_operand.vmem [shape: f32[3,32,32], index: 6, kind: input, shape index: {}]
  %s7 = inlined_call_operand.vmem [shape: f32[3,1,32], index: 7, kind: input, shape index: {}]
  %s8 = inlined_call_operand.hbm [shape: f32[16,128], index: 8, kind: output, shape index: {}]
  %s9 = sld [smem:[#allocation0]]
  $region42: #{gan_mpnn_forward.1} parent=0
    _
  %s11 = ssub.s32 1, %s9
  %s12 = scalar_select 0, %s11, %s9
  $region1: #{gan_mpnn_forward.1} parent=0
    #allocation3 [shape = 'u8[8192]{0}', space=vmem, size = 0x2000, scoped, tag = 'output window, operand 0, single buffered']
    #allocation4 [shape = 's32[1]{0}', space=sflag, size = 0x4, scoped, tag = 'scoped memory for gan_mpnn_forward.1']
    %13 = vsyncpa [#allocation4], 0
    // Predicated region
    $region2: #{gan_mpnn_forward.1} parent=1 // pred_check
      _
    $region3: #{gan_mpnn_forward.1} parent=1 // pred_check_branch
      %15 = sbr.rel (0) target = $region5
    $region4: #{gan_mpnn_forward.1} parent=1 // pred_region
      _
    $region5: #{gan_mpnn_forward.1} parent=1 // pred_fallthru
      _
    // Predicated region
    $region6: #{gan_mpnn_forward.1} parent=1 // pred_check
      _
    $region7: #{gan_mpnn_forward.1} parent=1 // pred_check_branch
      %17 = sbr.rel (0) target = $region9
    $region8: #{gan_mpnn_forward.1} parent=1 // pred_region
      _
    $region9: #{gan_mpnn_forward.1} parent=1 // pred_fallthru
      _
    // Predicated region
    $region10: #{gan_mpnn_forward.1} parent=1 // pred_check
      _
    $region11: #{gan_mpnn_forward.1} parent=1 // pred_check_branch
      %19 = sbr.rel (0) target = $region13
    $region12: #{gan_mpnn_forward.1} parent=1 // pred_region
      _
    $region13: #{gan_mpnn_forward.1} parent=1 // pred_fallthru
      _
    // Predicated region
    $region14: #{gan_mpnn_forward.1} parent=1 // pred_check
      _
    $region15: #{gan_mpnn_forward.1} parent=1 // pred_check_branch
      %21 = sbr.rel (0) target = $region17
    $region16: #{gan_mpnn_forward.1} parent=1 // pred_region
      _
    $region17: #{gan_mpnn_forward.1} parent=1 // pred_fallthru
      _
    // Predicated region
    $region18: #{gan_mpnn_forward.1} parent=1 // pred_check
      _
    $region19: #{gan_mpnn_forward.1} parent=1 // pred_check_branch
      %23 = sbr.rel (0) target = $region21
    $region20: #{gan_mpnn_forward.1} parent=1 // pred_region
      _
    $region21: #{gan_mpnn_forward.1} parent=1 // pred_fallthru
      _
    // Predicated region
    $region22: #{gan_mpnn_forward.1} parent=1 // pred_check
      _
    $region23: #{gan_mpnn_forward.1} parent=1 // pred_check_branch
      %25 = sbr.rel (0) target = $region25
    $region24: #{gan_mpnn_forward.1} parent=1 // pred_region
      _
    $region25: #{gan_mpnn_forward.1} parent=1 // pred_fallthru
      _
    // Predicated region
    $region26: #{gan_mpnn_forward.1} parent=1 // pred_check
      _
    $region27: #{gan_mpnn_forward.1} parent=1 // pred_check_branch
      %27 = sbr.rel (0) target = $region29
    $region28: #{gan_mpnn_forward.1} parent=1 // pred_region
      _
    $region29: #{gan_mpnn_forward.1} parent=1 // pred_fallthru
      _
    // Predicated region
    $region30: #{gan_mpnn_forward.1} parent=1 // pred_check
      _
    $region31: #{gan_mpnn_forward.1} parent=1 // pred_check_branch
      %29 = sbr.rel (0) target = $region33
    $region32: #{gan_mpnn_forward.1} parent=1 // pred_region
      _
    $region33: #{gan_mpnn_forward.1} parent=1 // pred_fallthru
      _
    %v30 = vld [vmem:[%s0] sm:$0xff]
    %v31 = vld [vmem:[%s0 + $0x8] sm:$0xff]
    %v32 = vld [vmem:[%s0 + $0x10] sm:$0xff]
    %v33 = vld [vmem:[%s0 + $0x18] sm:$0xff]
    %v34 = vld [vmem:[%s0 + $0x20] sm:$0xff]
    %v35 = vld [vmem:[%s0 + $0x28] sm:$0xff]
    %v36 = vld [vmem:[%s0 + $0x30] sm:$0xff]
    %v37 = vld [vmem:[%s0 + $0x38] sm:$0xff]
    %v38 = vld [vmem:[%s0 + $0x40] sm:$0xff]
    %v39 = vld [vmem:[%s0 + $0x48] sm:$0xff]
    %v40 = vld [vmem:[%s0 + $0x50] sm:$0xff]
    %v41 = vld [vmem:[%s0 + $0x58] sm:$0xff]
    %v42 = vld [vmem:[%s0 + $0x60] sm:$0xff]
    %v43 = vld [vmem:[%s0 + $0x68] sm:$0xff]
    %v44 = vld [vmem:[%s0 + $0x70] sm:$0xff]
    %v45 = vld [vmem:[%s0 + $0x78] sm:$0xff]
    %v46 = vld [vmem:[%s2] sm:$0xff]
    %v47 = vld [vmem:[%s2 + $0x8] sm:$0x1]
    %v48 = vld [vmem:[%s3] sm:$0x1]
    %v50 = vlaneseq
    %v51 = vshrl.u32 %v50, 7
    %v52 = vsub.s32 0, %v51
    %v53 = vrot.slane %v48, %v52
    %vm55 = vcmask 72704
    %v57 = vsel %vm55, %v30, 0
    %v60 = vsel %vm55, %v31, 0
    %v63 = vsel %vm55, %v32, 0
    %v66 = vsel %vm55, %v33, 0
    %v69 = vsel %vm55, %v34, 0
    %v72 = vsel %vm55, %v35, 0
    %v75 = vsel %vm55, %v36, 0
    %v78 = vsel %vm55, %v37, 0
    %v81 = vsel %vm55, %v38, 0
    %v84 = vsel %vm55, %v39, 0
    %v87 = vsel %vm55, %v40, 0
    %v90 = vsel %vm55, %v41, 0
    %v93 = vsel %vm55, %v42, 0
    %v96 = vsel %vm55, %v43, 0
    %v99 = vsel %vm55, %v44, 0
    %v102 = vsel %vm55, %v45, 0
    %vm104 = vcmask 1040384
    %v106 = vsel %vm104, %v47, 0
    %108 = vmatprep.subr.mxu0 0.0
    %109 = vmatpush1.msra.mxu0 %v46
    %110 = vmatprep.subr.mxu0 0.0
    %111 = vmatpush1.msra.mxu0 %v106
    %112 = vmatprep.subr.mxu0 0.0
    %113 = vmatpush1.msra.mxu0 0.0
    %114 = vmatprep.subr.mxu0 0.0
    %115 = vmatpush1.msra.mxu0 0.0
    %116 = vmatprep.subr.mxu0 0.0
    %117 = vmatpush1.msra.mxu0 0.0
    %118 = vmatprep.subr.mxu0 0.0
    %119 = vmatpush1.msra.mxu0 0.0
    %120 = vmatprep.subr.mxu0 0.0
    %121 = vmatpush1.msra.mxu0 0.0
    %122 = vmatprep.subr.mxu0 0.0
    %123 = vmatpush1.msra.mxu0 0.0
    %124 = vmatprep.subr.mxu0 0.0
    %125 = vmatpush1.msra.mxu0 0.0
    %126 = vmatprep.subr.mxu0 0.0
    %127 = vmatpush1.msra.mxu0 0.0
    %128 = vmatprep.subr.mxu0 0.0
    %129 = vmatpush1.msra.mxu0 0.0
    %130 = vmatprep.subr.mxu0 0.0
    %131 = vmatpush1.msra.mxu0 0.0
    %132 = vmatprep.subr.mxu0 0.0
    %133 = vmatpush1.msra.mxu0 0.0
    %134 = vmatprep.subr.mxu0 0.0
    %135 = vmatpush1.msra.mxu0 0.0
    %136 = vmatprep.subr.mxu0 0.0
    %137 = vmatpush1.msra.mxu0 0.0
    %138 = vmatprep.subr.mxu0 0.0
    %139 = vmatpush1.msra.mxu0 0.0
    %140 = vmatprep.subr.mxu0 0.0
    %141 = vmatpush1.msra.mxu0 0.0
    %142 = vmatprep.subr.mxu0 0.0
    %143 = vmatpush1.msra.mxu0 0.0
    %144 = vmatprep.subr.mxu0 0.0
    %145 = vmatpush1.msra.mxu0 0.0
    %146 = vmatprep.subr.mxu0 0.0
    %147 = vmatpush1.msra.mxu0 0.0
    %148 = vmatprep.subr.mxu0 0.0
    %149 = vmatpush1.msra.mxu0 0.0
    %150 = vmatprep.subr.mxu0 0.0
    %151 = vmatpush1.msra.mxu0 0.0
    %152 = vmatprep.subr.mxu0 0.0
    %153 = vmatpush1.msra.mxu0 0.0
    %154 = vmatprep.subr.mxu0 0.0
    %155 = vmatpush1.msra.mxu0 0.0
    %156 = vmatprep.subr.mxu0 0.0
    %157 = vmatpush1.msra.mxu0 0.0
    %158 = vmatprep.subr.mxu0 0.0
    %159 = vmatpush1.msra.mxu0 0.0
    %160 = vmatprep.subr.mxu0 0.0
    %161 = vmatpush1.msra.mxu0 0.0
    %162 = vmatprep.subr.mxu0 0.0
    %163 = vmatpush1.msra.mxu0 0.0
    %164 = vmatprep.subr.mxu0 0.0
    %165 = vmatpush1.msra.mxu0 0.0
    %166 = vmatprep.subr.mxu0 0.0
    %167 = vmatpush1.msra.mxu0 0.0
    %168 = vmatprep.subr.mxu0 0.0
    %169 = vmatpush1.msra.mxu0 0.0
    %170 = vmatprep.subr.mxu0 0.0
    %171 = vmatpush1.msra.mxu0 0.0
    %172 = vmatprep.mubr.f32.mxu0 0.0
    %173 = vmatmul.mubr.f32.gmra.mrb[0].mxu0 %v57
    %v174 = vpop.f32.mrb[0].mxu0
    %v175 = vadd.f32 %v53, %v174
    %v176 = vpop.f32.mrb[0].mxu0
    %177 = vmatprep.mubr.f32.mxu0 0.0
    %178 = vmatmul.mubr.f32.gmra.mrb[0].mxu0 %v60
    %v179 = vpop.f32.mrb[0].mxu0
    %v180 = vadd.f32 %v53, %v179
    %v181 = vpop.f32.mrb[0].mxu0
    %182 = vmatprep.mubr.f32.mxu0 0.0
    %183 = vmatmul.mubr.f32.gmra.mrb[0].mxu0 %v63
    %v184 = vpop.f32.mrb[0].mxu0
    %v185 = vadd.f32 %v53, %v184
    %v186 = vpop.f32.mrb[0].mxu0
    %187 = vmatprep.mubr.f32.mxu0 0.0
    %188 = vmatmul.mubr.f32.gmra.mrb[0].mxu0 %v66
    %v189 = vpop.f32.mrb[0].mxu0
    %v190 = vadd.f32 %v53, %v189
    %v191 = vpop.f32.mrb[0].mxu0
    %192 = vmatprep.mubr.f32.mxu0 0.0
    %193 = vmatmul.mubr.f32.gmra.mrb[0].mxu0 %v69
    %v194 = vpop.f32.mrb[0].mxu0
    %v195 = vadd.f32 %v53, %v194
    %v196 = vpop.f32.mrb[0].mxu0
    %197 = vmatprep.mubr.f32.mxu0 0.0
    %198 = vmatmul.mubr.f32.gmra.mrb[0].mxu0 %v72
    %v199 = vpop.f32.mrb[0].mxu0
    %v200 = vadd.f32 %v53, %v199
    %v201 = vpop.f32.mrb[0].mxu0
    %202 = vmatprep.mubr.f32.mxu0 0.0
    %203 = vmatmul.mubr.f32.gmra.mrb[0].mxu0 %v75
    %v204 = vpop.f32.mrb[0].mxu0
    %v205 = vadd.f32 %v53, %v204
    %v206 = vpop.f32.mrb[0].mxu0
    %207 = vmatprep.mubr.f32.mxu0 0.0
    %208 = vmatmul.mubr.f32.gmra.mrb[0].mxu0 %v78
    %v209 = vpop.f32.mrb[0].mxu0
    %v210 = vadd.f32 %v53, %v209
    %v211 = vpop.f32.mrb[0].mxu0
    %212 = vmatprep.mubr.f32.mxu0 0.0
    %213 = vmatmul.mubr.f32.gmra.mrb[0].mxu0 %v81
    %v214 = vpop.f32.mrb[0].mxu0
    %v215 = vadd.f32 %v53, %v214
    %v216 = vpop.f32.mrb[0].mxu0
    %217 = vmatprep.mubr.f32.mxu0 0.0
    %218 = vmatmul.mubr.f32.gmra.mrb[0].mxu0 %v84
    %v219 = vpop.f32.mrb[0].mxu0
    %v220 = vadd.f32 %v53, %v219
    %v221 = vpop.f32.mrb[0].mxu0
    %222 = vmatprep.mubr.f32.mxu0 0.0
    %223 = vmatmul.mubr.f32.gmra.mrb[0].mxu0 %v87
    %v224 = vpop.f32.mrb[0].mxu0
    %v225 = vadd.f32 %v53, %v224
    %v226 = vpop.f32.mrb[0].mxu0
    %227 = vmatprep.mubr.f32.mxu0 0.0
    %228 = vmatmul.mubr.f32.gmra.mrb[0].mxu0 %v90
    %v229 = vpop.f32.mrb[0].mxu0
    %v230 = vadd.f32 %v53, %v229
    %v231 = vpop.f32.mrb[0].mxu0
    %232 = vmatprep.mubr.f32.mxu0 0.0
    %233 = vmatmul.mubr.f32.gmra.mrb[0].mxu0 %v93
    %v234 = vpop.f32.mrb[0].mxu0
    %v235 = vadd.f32 %v53, %v234
    %v236 = vpop.f32.mrb[0].mxu0
    %237 = vmatprep.mubr.f32.mxu0 0.0
    %238 = vmatmul.mubr.f32.gmra.mrb[0].mxu0 %v96
    %v239 = vpop.f32.mrb[0].mxu0
    %v240 = vadd.f32 %v53, %v239
    %v241 = vpop.f32.mrb[0].mxu0
    %242 = vmatprep.mubr.f32.mxu0 0.0
    %243 = vmatmul.mubr.f32.gmra.mrb[0].mxu0 %v99
    %v244 = vpop.f32.mrb[0].mxu0
    %v245 = vadd.f32 %v53, %v244
    %v246 = vpop.f32.mrb[0].mxu0
    %247 = vmatprep.mubr.f32.mxu0 0.0
    %248 = vmatmul.mubr.f32.gmra.mrb[0].mxu0 %v102
    %v249 = vpop.f32.mrb[0].mxu0
    %v250 = vadd.f32 %v53, %v249
    %v251 = vpop.f32.mrb[0].mxu0
    %252 = vdwg.mxu0
    %v253 = vmax.f32 %v175, 0.0
    %v254 = vmax.f32 %v180, 0.0
    %v255 = vmax.f32 %v185, 0.0
    %v256 = vmax.f32 %v190, 0.0
    %v257 = vmax.f32 %v195, 0.0
    %v258 = vmax.f32 %v200, 0.0
    %v259 = vmax.f32 %v205, 0.0
    %v260 = vmax.f32 %v210, 0.0
    %v261 = vmax.f32 %v215, 0.0
    %v262 = vmax.f32 %v220, 0.0
    %v263 = vmax.f32 %v225, 0.0
    %v264 = vmax.f32 %v230, 0.0
    %v265 = vmax.f32 %v235, 0.0
    %v266 = vmax.f32 %v240, 0.0
    %v267 = vmax.f32 %v245, 0.0
    %v268 = vmax.f32 %v250, 0.0
    %269 = vst [vmem:[#allocation2] sm:$0xff] 0.0
    %270 = vst [vmem:[#allocation2 + $0x8] sm:$0xff] 0.0
    %271 = vst [vmem:[#allocation2 + $0x10] sm:$0xff] 0.0
    %272 = vst [vmem:[#allocation2 + $0x18] sm:$0xff] 0.0
    %273 = vst [vmem:[#allocation2 + $0x20] sm:$0xff] 0.0
    %274 = vst [vmem:[#allocation2 + $0x28] sm:$0xff] 0.0
    %275 = vst [vmem:[#allocation2 + $0x30] sm:$0xff] 0.0
    %276 = vst [vmem:[#allocation2 + $0x38] sm:$0xff] 0.0
    %277 = vst [vmem:[#allocation2 + $0x40] sm:$0xff] 0.0
    %278 = vst [vmem:[#allocation2 + $0x48] sm:$0xff] 0.0
    %279 = vst [vmem:[#allocation2 + $0x50] sm:$0xff] 0.0
    %280 = vst [vmem:[#allocation2 + $0x58] sm:$0xff] 0.0
    %281 = vst [vmem:[#allocation2 + $0x60] sm:$0xff] 0.0
    %282 = vst [vmem:[#allocation2 + $0x68] sm:$0xff] 0.0
    %283 = vst [vmem:[#allocation2 + $0x70] sm:$0xff] 0.0
    %284 = vst [vmem:[#allocation2 + $0x78] sm:$0xff] 0.0
    %v285 = vld [vmem:[%s1] sm:$0xf]
    %v286 = vunpack.c.l.bf16 %v285
    %vm287 = vcmask 64512
    %288 = vst.msk [vmem:[#allocation2] sm:$0xff] %vm287, %v286
    %s289 = scalar_lea.vmem %s1, 4
    %v290 = vld [vmem:[%s289] sm:$0xf]
    %v291 = vunpack.c.l.bf16 %v290
    %293 = vrot.lane.b32.xlu0 %v291, 8
    %v294 = vpop.permute.xlu0 %293
    %vm296 = vcmask 130112
    %297 = vst.msk [vmem:[#allocation2 + $0x8] sm:$0xff] %vm296, %v294
    %s298 = scalar_lea.vmem %s1, 8
    %v299 = vld [vmem:[%s298] sm:$0xf]
    %v300 = vunpack.c.l.bf16 %v299
    %302 = vrot.lane.b32.xlu0 %v300, 16
    %v303 = vpop.permute.xlu0 %302
    %vm305 = vcmask 195712
    %306 = vst.msk [vmem:[#allocation2 + $0x10] sm:$0xff] %vm305, %v303
    %s307 = scalar_lea.vmem %s1, 12
    %v308 = vld [vmem:[%s307] sm:$0xf]
    %v309 = vunpack.c.l.bf16 %v308
    %311 = vrot.lane.b32.xlu0 %v309, 24
    %v312 = vpop.permute.xlu0 %311
    %vm314 = vcmask 261312
    %315 = vst.msk [vmem:[#allocation2 + $0x18] sm:$0xff] %vm314, %v312
    %s316 = scalar_lea.vmem %s1, 16
    %v317 = vld [vmem:[%s316] sm:$0xf]
    %v318 = vunpack.c.l.bf16 %v317
    %320 = vrot.lane.b32.xlu0 %v318, 32
    %v321 = vpop.permute.xlu0 %320
    %vm323 = vcmask 326912
    %324 = vst.msk [vmem:[#allocation2 + $0x20] sm:$0xff] %vm323, %v321
    %s325 = scalar_lea.vmem %s1, 20
    %v326 = vld [vmem:[%s325] sm:$0xf]
    %v327 = vunpack.c.l.bf16 %v326
    %329 = vrot.lane.b32.xlu0 %v327, 40
    %v330 = vpop.permute.xlu0 %329
    %vm332 = vcmask 392512
    %333 = vst.msk [vmem:[#allocation2 + $0x28] sm:$0xff] %vm332, %v330
    %s334 = scalar_lea.vmem %s1, 24
    %v335 = vld [vmem:[%s334] sm:$0xf]
    %v336 = vunpack.c.l.bf16 %v335
    %338 = vrot.lane.b32.xlu0 %v336, 48
    %v339 = vpop.permute.xlu0 %338
    %vm341 = vcmask 458112
    %342 = vst.msk [vmem:[#allocation2 + $0x30] sm:$0xff] %vm341, %v339
    %s343 = scalar_lea.vmem %s1, 28
    %v344 = vld [vmem:[%s343] sm:$0xf]
    %v345 = vunpack.c.l.bf16 %v344
    %347 = vrot.lane.b32.xlu0 %v345, 56
    %v348 = vpop.permute.xlu0 %347
    %vm350 = vcmask 523712
    %351 = vst.msk [vmem:[#allocation2 + $0x38] sm:$0xff] %vm350, %v348
    %s352 = scalar_lea.vmem %s1, 32
    %v353 = vld [vmem:[%s352] sm:$0xf]
    %v354 = vunpack.c.l.bf16 %v353
    %356 = vrot.lane.b32.xlu0 %v354, 64
    %v357 = vpop.permute.xlu0 %356
    %vm359 = vcmask 589312
    %360 = vst.msk [vmem:[#allocation2 + $0x40] sm:$0xff] %vm359, %v357
    %s361 = scalar_lea.vmem %s1, 36
    %v362 = vld [vmem:[%s361] sm:$0xf]
    %v363 = vunpack.c.l.bf16 %v362
    %365 = vrot.lane.b32.xlu0 %v363, 72
    %v366 = vpop.permute.xlu0 %365
    %vm368 = vcmask 654912
    %369 = vst.msk [vmem:[#allocation2 + $0x48] sm:$0xff] %vm368, %v366
    %s370 = scalar_lea.vmem %s1, 40
    %v371 = vld [vmem:[%s370] sm:$0xf]
    %v372 = vunpack.c.l.bf16 %v371
    %374 = vrot.lane.b32.xlu0 %v372, 80
    %v375 = vpop.permute.xlu0 %374
    %vm377 = vcmask 720512
    %378 = vst.msk [vmem:[#allocation2 + $0x50] sm:$0xff] %vm377, %v375
    %s379 = scalar_lea.vmem %s1, 44
    %v380 = vld [vmem:[%s379] sm:$0xf]
    %v381 = vunpack.c.l.bf16 %v380
    %383 = vrot.lane.b32.xlu0 %v381, 88
    %v384 = vpop.permute.xlu0 %383
    %vm386 = vcmask 786112
    %387 = vst.msk [vmem:[#allocation2 + $0x58] sm:$0xff] %vm386, %v384
    %s388 = scalar_lea.vmem %s1, 48
    %v389 = vld [vmem:[%s388] sm:$0xf]
    %v390 = vunpack.c.l.bf16 %v389
    %392 = vrot.lane.b32.xlu0 %v390, 96
    %v393 = vpop.permute.xlu0 %392
    %vm395 = vcmask 851712
    %396 = vst.msk [vmem:[#allocation2 + $0x60] sm:$0xff] %vm395, %v393
    %s397 = scalar_lea.vmem %s1, 52
    %v398 = vld [vmem:[%s397] sm:$0xf]
    %v399 = vunpack.c.l.bf16 %v398
    %401 = vrot.lane.b32.xlu0 %v399, 104
    %v402 = vpop.permute.xlu0 %401
    %vm404 = vcmask 917312
    %405 = vst.msk [vmem:[#allocation2 + $0x68] sm:$0xff] %vm404, %v402
    %s406 = scalar_lea.vmem %s1, 56
    %v407 = vld [vmem:[%s406] sm:$0xf]
    %v408 = vunpack.c.l.bf16 %v407
    %410 = vrot.lane.b32.xlu0 %v408, 112
    %v411 = vpop.permute.xlu0 %410
    %vm413 = vcmask 982912
    %414 = vst.msk [vmem:[#allocation2 + $0x70] sm:$0xff] %vm413, %v411
    %s415 = scalar_lea.vmem %s1, 60
    %v416 = vld [vmem:[%s415] sm:$0xf]
    %v417 = vunpack.c.l.bf16 %v416
    %419 = vrot.lane.b32.xlu0 %v417, 120
    %v420 = vpop.permute.xlu0 %419
    %vm422 = vcmask 1048512
    %423 = vst.msk [vmem:[#allocation2 + $0x78] sm:$0xff] %vm422, %v420
    %v424 = vld [vmem:[%s4] sm:$0xff]
    %v425 = vld [vmem:[%s4 + $0x8] sm:$0xff]
    %v426 = vld [vmem:[%s4 + $0x10] sm:$0xff]
    %v427 = vld [vmem:[%s4 + $0x18] sm:$0xff]
    %v428 = vld [vmem:[%s5] sm:$0x1]
    %v430 = vlaneseq
    %v431 = vshrl.u32 %v430, 7
    %v432 = vsub.s32 0, %v431
    %v433 = vrot.slane %v428, %v432
    %vm435 = vcmask 261120
    %v437 = vsel %vm435, %v253, 0
    %v440 = vsel %vm435, %v254, 0
    %v443 = vsel %vm435, %v255, 0
    %v446 = vsel %vm435, %v256, 0
    %v449 = vsel %vm435, %v257, 0
    %v452 = vsel %vm435, %v258, 0
    %v455 = vsel %vm435, %v259, 0
    %v458 = vsel %vm435, %v260, 0
    %v461 = vsel %vm435, %v261, 0
    %v464 = vsel %vm435, %v262, 0
    %v467 = vsel %vm435, %v263, 0
    %v470 = vsel %vm435, %v264, 0
    %v473 = vsel %vm435, %v265, 0
    %v476 = vsel %vm435, %v266, 0
    %v479 = vsel %vm435, %v267, 0
    %v482 = vsel %vm435, %v268, 0
    %484 = vmatprep.subr.mxu0 0.0
    %485 = vmatpush1.msra.mxu0 %v424
    %486 = vmatprep.subr.mxu0 0.0
    %487 = vmatpush1.msra.mxu0 %v425
    %488 = vmatprep.subr.mxu0 0.0
    %489 = vmatpush1.msra.mxu0 %v426
    %490 = vmatprep.subr.mxu0 0.0
    %491 = vmatpush1.msra.mxu0 %v427
    %492 = vmatprep.subr.mxu0 0.0
    %493 = vmatpush1.msra.mxu0 0.0
    %494 = vmatprep.subr.mxu0 0.0
    %495 = vmatpush1.msra.mxu0 0.0
    %496 = vmatprep.subr.mxu0 0.0
    %497 = vmatpush1.msra.mxu0 0.0
    %498 = vmatprep.subr.mxu0 0.0
    %499 = vmatpush1.msra.mxu0 0.0
    %500 = vmatprep.subr.mxu0 0.0
    %501 = vmatpush1.msra.mxu0 0.0
    %502 = vmatprep.subr.mxu0 0.0
    %503 = vmatpush1.msra.mxu0 0.0
    %504 = vmatprep.subr.mxu0 0.0
    %505 = vmatpush1.msra.mxu0 0.0
    %506 = vmatprep.subr.mxu0 0.0
    %507 = vmatpush1.msra.mxu0 0.0
    %508 = vmatprep.subr.mxu0 0.0
    %509 = vmatpush1.msra.mxu0 0.0
    %510 = vmatprep.subr.mxu0 0.0
    %511 = vmatpush1.msra.mxu0 0.0
    %512 = vmatprep.subr.mxu0 0.0
    %513 = vmatpush1.msra.mxu0 0.0
    %514 = vmatprep.subr.mxu0 0.0
    %515 = vmatpush1.msra.mxu0 0.0
    %516 = vmatprep.subr.mxu0 0.0
    %517 = vmatpush1.msra.mxu0 0.0
    %518 = vmatprep.subr.mxu0 0.0
    %519 = vmatpush1.msra.mxu0 0.0
    %520 = vmatprep.subr.mxu0 0.0
    %521 = vmatpush1.msra.mxu0 0.0
    %522 = vmatprep.subr.mxu0 0.0
    %523 = vmatpush1.msra.mxu0 0.0
    %524 = vmatprep.subr.mxu0 0.0
    %525 = vmatpush1.msra.mxu0 0.0
    %526 = vmatprep.subr.mxu0 0.0
    %527 = vmatpush1.msra.mxu0 0.0
    %528 = vmatprep.subr.mxu0 0.0
    %529 = vmatpush1.msra.mxu0 0.0
    %530 = vmatprep.subr.mxu0 0.0
    %531 = vmatpush1.msra.mxu0 0.0
    %532 = vmatprep.subr.mxu0 0.0
    %533 = vmatpush1.msra.mxu0 0.0
    %534 = vmatprep.subr.mxu0 0.0
    %535 = vmatpush1.msra.mxu0 0.0
    %536 = vmatprep.subr.mxu0 0.0
    %537 = vmatpush1.msra.mxu0 0.0
    %538 = vmatprep.subr.mxu0 0.0
    %539 = vmatpush1.msra.mxu0 0.0
    %540 = vmatprep.subr.mxu0 0.0
    %541 = vmatpush1.msra.mxu0 0.0
    %542 = vmatprep.subr.mxu0 0.0
    %543 = vmatpush1.msra.mxu0 0.0
    %544 = vmatprep.subr.mxu0 0.0
    %545 = vmatpush1.msra.mxu0 0.0
    %546 = vmatprep.subr.mxu0 0.0
    %547 = vmatpush1.msra.mxu0 0.0
    %548 = vmatprep.mubr.f32.mxu0 0.0
    %549 = vmatmul.mubr.f32.gmra.mrb[0].mxu0 %v437
    %v550 = vpop.f32.mrb[0].mxu0
    %v551 = vadd.f32 %v433, %v550
    %v552 = vpop.f32.mrb[0].mxu0
    %553 = vmatprep.mubr.f32.mxu0 0.0
    %554 = vmatmul.mubr.f32.gmra.mrb[0].mxu0 %v440
    %v555 = vpop.f32.mrb[0].mxu0
    %v556 = vadd.f32 %v433, %v555
    %v557 = vpop.f32.mrb[0].mxu0
    %558 = vmatprep.mubr.f32.mxu0 0.0
    %559 = vmatmul.mubr.f32.gmra.mrb[0].mxu0 %v443
    %v560 = vpop.f32.mrb[0].mxu0
    %v561 = vadd.f32 %v433, %v560
    %v562 = vpop.f32.mrb[0].mxu0
    %563 = vmatprep.mubr.f32.mxu0 0.0
    %564 = vmatmul.mubr.f32.gmra.mrb[0].mxu0 %v446
    %v565 = vpop.f32.mrb[0].mxu0
    %v566 = vadd.f32 %v433, %v565
    %v567 = vpop.f32.mrb[0].mxu0
    %568 = vmatprep.mubr.f32.mxu0 0.0
    %569 = vmatmul.mubr.f32.gmra.mrb[0].mxu0 %v449
    %v570 = vpop.f32.mrb[0].mxu0
    %v571 = vadd.f32 %v433, %v570
    %v572 = vpop.f32.mrb[0].mxu0
    %573 = vmatprep.mubr.f32.mxu0 0.0
    %574 = vmatmul.mubr.f32.gmra.mrb[0].mxu0 %v452
    %v575 = vpop.f32.mrb[0].mxu0
    %v576 = vadd.f32 %v433, %v575
    %v577 = vpop.f32.mrb[0].mxu0
    %578 = vmatprep.mubr.f32.mxu0 0.0
    %579 = vmatmul.mubr.f32.gmra.mrb[0].mxu0 %v455
    %v580 = vpop.f32.mrb[0].mxu0
    %v581 = vadd.f32 %v433, %v580
    %v582 = vpop.f32.mrb[0].mxu0
    %583 = vmatprep.mubr.f32.mxu0 0.0
    %584 = vmatmul.mubr.f32.gmra.mrb[0].mxu0 %v458
    %v585 = vpop.f32.mrb[0].mxu0
    %v586 = vadd.f32 %v433, %v585
    %v587 = vpop.f32.mrb[0].mxu0
    %588 = vmatprep.mubr.f32.mxu0 0.0
    %589 = vmatmul.mubr.f32.gmra.mrb[0].mxu0 %v461
    %v590 = vpop.f32.mrb[0].mxu0
    %v591 = vadd.f32 %v433, %v590
    %v592 = vpop.f32.mrb[0].mxu0
    %593 = vmatprep.mubr.f32.mxu0 0.0
    %594 = vmatmul.mubr.f32.gmra.mrb[0].mxu0 %v464
    %v595 = vpop.f32.mrb[0].mxu0
    %v596 = vadd.f32 %v433, %v595
    %v597 = vpop.f32.mrb[0].mxu0
    %598 = vmatprep.mubr.f32.mxu0 0.0
    %599 = vmatmul.mubr.f32.gmra.mrb[0].mxu0 %v467
    %v600 = vpop.f32.mrb[0].mxu0
    %v601 = vadd.f32 %v433, %v600
    %v602 = vpop.f32.mrb[0].mxu0
    %603 = vmatprep.mubr.f32.mxu0 0.0
    %604 = vmatmul.mubr.f32.gmra.mrb[0].mxu0 %v470
    %v605 = vpop.f32.mrb[0].mxu0
    %v606 = vadd.f32 %v433, %v605
    %v607 = vpop.f32.mrb[0].mxu0
    %608 = vmatprep.mubr.f32.mxu0 0.0
    %609 = vmatmul.mubr.f32.gmra.mrb[0].mxu0 %v473
    %v610 = vpop.f32.mrb[0].mxu0
    %v611 = vadd.f32 %v433, %v610
    %v612 = vpop.f32.mrb[0].mxu0
    %613 = vmatprep.mubr.f32.mxu0 0.0
    %614 = vmatmul.mubr.f32.gmra.mrb[0].mxu0 %v476
    %v615 = vpop.f32.mrb[0].mxu0
    %v616 = vadd.f32 %v433, %v615
    %v617 = vpop.f32.mrb[0].mxu0
    %618 = vmatprep.mubr.f32.mxu0 0.0
    %619 = vmatmul.mubr.f32.gmra.mrb[0].mxu0 %v479
    %v620 = vpop.f32.mrb[0].mxu0
    %v621 = vadd.f32 %v433, %v620
    %v622 = vpop.f32.mrb[0].mxu0
    %623 = vmatprep.mubr.f32.mxu0 0.0
    %624 = vmatmul.mubr.f32.gmra.mrb[0].mxu0 %v482
    %v625 = vpop.f32.mrb[0].mxu0
    %v626 = vadd.f32 %v433, %v625
    %v627 = vpop.f32.mrb[0].mxu0
    %628 = vdwg.mxu0
    %v629 = vmax.f32 %v551, 0.0
    %v630 = vmax.f32 %v556, 0.0
    %v631 = vmax.f32 %v561, 0.0
    %v632 = vmax.f32 %v566, 0.0
    %v633 = vmax.f32 %v571, 0.0
    %v634 = vmax.f32 %v576, 0.0
    %v635 = vmax.f32 %v581, 0.0
    %v636 = vmax.f32 %v586, 0.0
    %v637 = vmax.f32 %v591, 0.0
    %v638 = vmax.f32 %v596, 0.0
    %v639 = vmax.f32 %v601, 0.0
    %v640 = vmax.f32 %v606, 0.0
    %v641 = vmax.f32 %v611, 0.0
    %v642 = vmax.f32 %v616, 0.0
    %v643 = vmax.f32 %v621, 0.0
    %v644 = vmax.f32 %v626, 0.0
    %v645 = vld [vmem:[#allocation2] sm:$0xff]
    %v646 = vld [vmem:[#allocation2 + $0x8] sm:$0xff]
    %v647 = vld [vmem:[#allocation2 + $0x10] sm:$0xff]
    %v648 = vld [vmem:[#allocation2 + $0x18] sm:$0xff]
    %v649 = vld [vmem:[#allocation2 + $0x20] sm:$0xff]
    %v650 = vld [vmem:[#allocation2 + $0x28] sm:$0xff]
    %v651 = vld [vmem:[#allocation2 + $0x30] sm:$0xff]
    %v652 = vld [vmem:[#allocation2 + $0x38] sm:$0xff]
    %v653 = vld [vmem:[#allocation2 + $0x40] sm:$0xff]
    %v654 = vld [vmem:[#allocation2 + $0x48] sm:$0xff]
    %v655 = vld [vmem:[#allocation2 + $0x50] sm:$0xff]
    %v656 = vld [vmem:[#allocation2 + $0x58] sm:$0xff]
    %v657 = vld [vmem:[#allocation2 + $0x60] sm:$0xff]
    %v658 = vld [vmem:[#allocation2 + $0x68] sm:$0xff]
    %v659 = vld [vmem:[#allocation2 + $0x70] sm:$0xff]
    %v660 = vld [vmem:[#allocation2 + $0x78] sm:$0xff]
    %661 = vmatprep.subr.mxu0 0.0
    %662 = vmatpush1.msra.mxu0 %v629
    %663 = vmatprep.subr.mxu0 0.0
    %664 = vmatpush1.msra.mxu0 %v630
    %665 = vmatprep.subr.mxu0 0.0
    %666 = vmatpush1.msra.mxu0 %v631
    %667 = vmatprep.subr.mxu0 0.0
    %668 = vmatpush1.msra.mxu0 %v632
    %669 = vmatprep.subr.mxu0 0.0
    %670 = vmatpush1.msra.mxu0 %v633
    %671 = vmatprep.subr.mxu0 0.0
    %672 = vmatpush1.msra.mxu0 %v634
    %673 = vmatprep.subr.mxu0 0.0
    %674 = vmatpush1.msra.mxu0 %v635
    %675 = vmatprep.subr.mxu0 0.0
    %676 = vmatpush1.msra.mxu0 %v636
    %677 = vmatprep.subr.mxu0 0.0
    %678 = vmatpush1.msra.mxu0 %v637
    %679 = vmatprep.subr.mxu0 0.0
    %680 = vmatpush1.msra.mxu0 %v638
    %681 = vmatprep.subr.mxu0 0.0
    %682 = vmatpush1.msra.mxu0 %v639
    %683 = vmatprep.subr.mxu0 0.0
    %684 = vmatpush1.msra.mxu0 %v640
    %685 = vmatprep.subr.mxu0 0.0
    %686 = vmatpush1.msra.mxu0 %v641
    %687 = vmatprep.subr.mxu0 0.0
    %688 = vmatpush1.msra.mxu0 %v642
    %689 = vmatprep.subr.mxu0 0.0
    %690 = vmatpush1.msra.mxu0 %v643
    %691 = vmatprep.subr.mxu0 0.0
    %692 = vmatpush1.msra.mxu0 %v644
    %693 = vmatprep.subr.mxu0 0.0
    %694 = vmatpush1.msra.mxu0 0.0
    %695 = vmatprep.subr.mxu0 0.0
    %696 = vmatpush1.msra.mxu0 0.0
    %697 = vmatprep.subr.mxu0 0.0
    %698 = vmatpush1.msra.mxu0 0.0
    %699 = vmatprep.subr.mxu0 0.0
    %700 = vmatpush1.msra.mxu0 0.0
    %701 = vmatprep.subr.mxu0 0.0
    %702 = vmatpush1.msra.mxu0 0.0
    %703 = vmatprep.subr.mxu0 0.0
    %704 = vmatpush1.msra.mxu0 0.0
    %705 = vmatprep.subr.mxu0 0.0
    %706 = vmatpush1.msra.mxu0 0.0
    %707 = vmatprep.subr.mxu0 0.0
    %708 = vmatpush1.msra.mxu0 0.0
    %709 = vmatprep.subr.mxu0 0.0
    %710 = vmatpush1.msra.mxu0 0.0
    %711 = vmatprep.subr.mxu0 0.0
    %712 = vmatpush1.msra.mxu0 0.0
    %713 = vmatprep.subr.mxu0 0.0
    %714 = vmatpush1.msra.mxu0 0.0
    %715 = vmatprep.subr.mxu0 0.0
    %716 = vmatpush1.msra.mxu0 0.0
    %717 = vmatprep.subr.mxu0 0.0
    %718 = vmatpush1.msra.mxu0 0.0
    %719 = vmatprep.subr.mxu0 0.0
    %720 = vmatpush1.msra.mxu0 0.0
    %721 = vmatprep.subr.mxu0 0.0
    %722 = vmatpush1.msra.mxu0 0.0
    %723 = vmatprep.subr.mxu0 0.0
    %724 = vmatpush1.msra.mxu0 0.0
    %725 = vmatprep.mubr.f32.mxu0 0.0
    %726 = vmatmul.mubr.f32.gmra.mrb[0].mxu0 %v645
    %v727 = vpop.f32.mrb[0].mxu0
    %v728 = vadd.f32 0.0, %v727
    %v729 = vpop.f32.mrb[0].mxu0
    %730 = vmatprep.mubr.f32.mxu0 0.0
    %731 = vmatmul.mubr.f32.gmra.mrb[0].mxu0 %v646
    %v732 = vpop.f32.mrb[0].mxu0
    %v733 = vadd.f32 0.0, %v732
    %v734 = vpop.f32.mrb[0].mxu0
    %735 = vmatprep.mubr.f32.mxu0 0.0
    %736 = vmatmul.mubr.f32.gmra.mrb[0].mxu0 %v647
    %v737 = vpop.f32.mrb[0].mxu0
    %v738 = vadd.f32 0.0, %v737
    %v739 = vpop.f32.mrb[0].mxu0
    %740 = vmatprep.mubr.f32.mxu0 0.0
    %741 = vmatmul.mubr.f32.gmra.mrb[0].mxu0 %v648
    %v742 = vpop.f32.mrb[0].mxu0
    %v743 = vadd.f32 0.0, %v742
    %v744 = vpop.f32.mrb[0].mxu0
    %745 = vmatprep.mubr.f32.mxu0 0.0
    %746 = vmatmul.mubr.f32.gmra.mrb[0].mxu0 %v649
    %v747 = vpop.f32.mrb[0].mxu0
    %v748 = vadd.f32 0.0, %v747
    %v749 = vpop.f32.mrb[0].mxu0
    %750 = vmatprep.mubr.f32.mxu0 0.0
    %751 = vmatmul.mubr.f32.gmra.mrb[0].mxu0 %v650
    %v752 = vpop.f32.mrb[0].mxu0
    %v753 = vadd.f32 0.0, %v752
    %v754 = vpop.f32.mrb[0].mxu0
    %755 = vmatprep.mubr.f32.mxu0 0.0
    %756 = vmatmul.mubr.f32.gmra.mrb[0].mxu0 %v651
    %v757 = vpop.f32.mrb[0].mxu0
    %v758 = vadd.f32 0.0, %v757
    %v759 = vpop.f32.mrb[0].mxu0
    %760 = vmatprep.mubr.f32.mxu0 0.0
    %761 = vmatmul.mubr.f32.gmra.mrb[0].mxu0 %v652
    %v762 = vpop.f32.mrb[0].mxu0
    %v763 = vadd.f32 0.0, %v762
    %v764 = vpop.f32.mrb[0].mxu0
    %765 = vmatprep.mubr.f32.mxu0 0.0
    %766 = vmatmul.mubr.f32.gmra.mrb[0].mxu0 %v653
    %v767 = vpop.f32.mrb[0].mxu0
    %v768 = vadd.f32 0.0, %v767
    %v769 = vpop.f32.mrb[0].mxu0
    %770 = vmatprep.mubr.f32.mxu0 0.0
    %771 = vmatmul.mubr.f32.gmra.mrb[0].mxu0 %v654
    %v772 = vpop.f32.mrb[0].mxu0
    %v773 = vadd.f32 0.0, %v772
    %v774 = vpop.f32.mrb[0].mxu0
    %775 = vmatprep.mubr.f32.mxu0 0.0
    %776 = vmatmul.mubr.f32.gmra.mrb[0].mxu0 %v655
    %v777 = vpop.f32.mrb[0].mxu0
    %v778 = vadd.f32 0.0, %v777
    %v779 = vpop.f32.mrb[0].mxu0
    %780 = vmatprep.mubr.f32.mxu0 0.0
    %781 = vmatmul.mubr.f32.gmra.mrb[0].mxu0 %v656
    %v782 = vpop.f32.mrb[0].mxu0
    %v783 = vadd.f32 0.0, %v782
    %v784 = vpop.f32.mrb[0].mxu0
    %785 = vmatprep.mubr.f32.mxu0 0.0
    %786 = vmatmul.mubr.f32.gmra.mrb[0].mxu0 %v657
    %v787 = vpop.f32.mrb[0].mxu0
    %v788 = vadd.f32 0.0, %v787
    %v789 = vpop.f32.mrb[0].mxu0
    %790 = vmatprep.mubr.f32.mxu0 0.0
    %791 = vmatmul.mubr.f32.gmra.mrb[0].mxu0 %v658
    %v792 = vpop.f32.mrb[0].mxu0
    %v793 = vadd.f32 0.0, %v792
    %v794 = vpop.f32.mrb[0].mxu0
    %795 = vmatprep.mubr.f32.mxu0 0.0
    %796 = vmatmul.mubr.f32.gmra.mrb[0].mxu0 %v659
    %v797 = vpop.f32.mrb[0].mxu0
    %v798 = vadd.f32 0.0, %v797
    %v799 = vpop.f32.mrb[0].mxu0
    %800 = vmatprep.mubr.f32.mxu0 0.0
    %801 = vmatmul.mubr.f32.gmra.mrb[0].mxu0 %v660
    %v802 = vpop.f32.mrb[0].mxu0
    %v803 = vadd.f32 0.0, %v802
    %v804 = vpop.f32.mrb[0].mxu0
    %805 = vdwg.mxu0
    %v806 = vld [vmem:[%s6] sm:$0xff]
    %v807 = vld [vmem:[%s6 + $0x8] sm:$0xff]
    %v808 = vld [vmem:[%s6 + $0x10] sm:$0xff]
    %v809 = vld [vmem:[%s6 + $0x18] sm:$0xff]
    %v810 = vld [vmem:[%s7] sm:$0x1]
    %v812 = vlaneseq
    %v813 = vshrl.u32 %v812, 7
    %v814 = vsub.s32 0, %v813
    %v815 = vrot.slane %v810, %v814
    %v818 = vsel %vm435, %v728, 0
    %v821 = vsel %vm435, %v733, 0
    %v824 = vsel %vm435, %v738, 0
    %v827 = vsel %vm435, %v743, 0
    %v830 = vsel %vm435, %v748, 0
    %v833 = vsel %vm435, %v753, 0
    %v836 = vsel %vm435, %v758, 0
    %v839 = vsel %vm435, %v763, 0
    %v842 = vsel %vm435, %v768, 0
    %v845 = vsel %vm435, %v773, 0
    %v848 = vsel %vm435, %v778, 0
    %v851 = vsel %vm435, %v783, 0
    %v854 = vsel %vm435, %v788, 0
    %v857 = vsel %vm435, %v793, 0
    %v860 = vsel %vm435, %v798, 0
    %v863 = vsel %vm435, %v803, 0
    %865 = vmatprep.subr.mxu0 0.0
    %866 = vmatpush1.msra.mxu0 %v806
    %867 = vmatprep.subr.mxu0 0.0
    %868 = vmatpush1.msra.mxu0 %v807
    %869 = vmatprep.subr.mxu0 0.0
    %870 = vmatpush1.msra.mxu0 %v808
    %871 = vmatprep.subr.mxu0 0.0
    %872 = vmatpush1.msra.mxu0 %v809
    %873 = vmatprep.subr.mxu0 0.0
    %874 = vmatpush1.msra.mxu0 0.0
    %875 = vmatprep.subr.mxu0 0.0
    %876 = vmatpush1.msra.mxu0 0.0
    %877 = vmatprep.subr.mxu0 0.0
    %878 = vmatpush1.msra.mxu0 0.0
    %879 = vmatprep.subr.mxu0 0.0
    %880 = vmatpush1.msra.mxu0 0.0
    %881 = vmatprep.subr.mxu0 0.0
    %882 = vmatpush1.msra.mxu0 0.0
    %883 = vmatprep.subr.mxu0 0.0
    %884 = vmatpush1.msra.mxu0 0.0
    %885 = vmatprep.subr.mxu0 0.0
    %886 = vmatpush1.msra.mxu0 0.0
    %887 = vmatprep.subr.mxu0 0.0
    %888 = vmatpush1.msra.mxu0 0.0
    %889 = vmatprep.subr.mxu0 0.0
    %890 = vmatpush1.msra.mxu0 0.0
    %891 = vmatprep.subr.mxu0 0.0
    %892 = vmatpush1.msra.mxu0 0.0
    %893 = vmatprep.subr.mxu0 0.0
    %894 = vmatpush1.msra.mxu0 0.0
    %895 = vmatprep.subr.mxu0 0.0
    %896 = vmatpush1.msra.mxu0 0.0
    %897 = vmatprep.subr.mxu0 0.0
    %898 = vmatpush1.msra.mxu0 0.0
    %899 = vmatprep.subr.mxu0 0.0
    %900 = vmatpush1.msra.mxu0 0.0
    %901 = vmatprep.subr.mxu0 0.0
    %902 = vmatpush1.msra.mxu0 0.0
    %903 = vmatprep.subr.mxu0 0.0
    %904 = vmatpush1.msra.mxu0 0.0
    %905 = vmatprep.subr.mxu0 0.0
    %906 = vmatpush1.msra.mxu0 0.0
    %907 = vmatprep.subr.mxu0 0.0
    %908 = vmatpush1.msra.mxu0 0.0
    %909 = vmatprep.subr.mxu0 0.0
    %910 = vmatpush1.msra.mxu0 0.0
    %911 = vmatprep.subr.mxu0 0.0
    %912 = vmatpush1.msra.mxu0 0.0
    %913 = vmatprep.subr.mxu0 0.0
    %914 = vmatpush1.msra.mxu0 0.0
    %915 = vmatprep.subr.mxu0 0.0
    %916 = vmatpush1.msra.mxu0 0.0
    %917 = vmatprep.subr.mxu0 0.0
    %918 = vmatpush1.msra.mxu0 0.0
    %919 = vmatprep.subr.mxu0 0.0
    %920 = vmatpush1.msra.mxu0 0.0
    %921 = vmatprep.subr.mxu0 0.0
    %922 = vmatpush1.msra.mxu0 0.0
    %923 = vmatprep.subr.mxu0 0.0
    %924 = vmatpush1.msra.mxu0 0.0
    %925 = vmatprep.subr.mxu0 0.0
    %926 = vmatpush1.msra.mxu0 0.0
    %927 = vmatprep.subr.mxu0 0.0
    %928 = vmatpush1.msra.mxu0 0.0
    %929 = vmatprep.mubr.f32.mxu0 0.0
    %930 = vmatmul.mubr.f32.gmra.mrb[0].mxu0 %v818
    %v931 = vpop.f32.mrb[0].mxu0
    %v932 = vadd.f32 %v815, %v931
    %v933 = vpop.f32.mrb[0].mxu0
    %934 = vmatprep.mubr.f32.mxu0 0.0
    %935 = vmatmul.mubr.f32.gmra.mrb[0].mxu0 %v821
    %v936 = vpop.f32.mrb[0].mxu0
    %v937 = vadd.f32 %v815, %v936
    %v938 = vpop.f32.mrb[0].mxu0
    %939 = vmatprep.mubr.f32.mxu0 0.0
    %940 = vmatmul.mubr.f32.gmra.mrb[0].mxu0 %v824
    %v941 = vpop.f32.mrb[0].mxu0
    %v942 = vadd.f32 %v815, %v941
    %v943 = vpop.f32.mrb[0].mxu0
    %944 = vmatprep.mubr.f32.mxu0 0.0
    %945 = vmatmul.mubr.f32.gmra.mrb[0].mxu0 %v827
    %v946 = vpop.f32.mrb[0].mxu0
    %v947 = vadd.f32 %v815, %v946
    %v948 = vpop.f32.mrb[0].mxu0
    %949 = vmatprep.mubr.f32.mxu0 0.0
    %950 = vmatmul.mubr.f32.gmra.mrb[0].mxu0 %v830
    %v951 = vpop.f32.mrb[0].mxu0
    %v952 = vadd.f32 %v815, %v951
    %v953 = vpop.f32.mrb[0].mxu0
    %954 = vmatprep.mubr.f32.mxu0 0.0
    %955 = vmatmul.mubr.f32.gmra.mrb[0].mxu0 %v833
    %v956 = vpop.f32.mrb[0].mxu0
    %v957 = vadd.f32 %v815, %v956
    %v958 = vpop.f32.mrb[0].mxu0
    %959 = vmatprep.mubr.f32.mxu0 0.0
    %960 = vmatmul.mubr.f32.gmra.mrb[0].mxu0 %v836
    %v961 = vpop.f32.mrb[0].mxu0
    %v962 = vadd.f32 %v815, %v961
    %v963 = vpop.f32.mrb[0].mxu0
    %964 = vmatprep.mubr.f32.mxu0 0.0
    %965 = vmatmul.mubr.f32.gmra.mrb[0].mxu0 %v839
    %v966 = vpop.f32.mrb[0].mxu0
    %v967 = vadd.f32 %v815, %v966
    %v968 = vpop.f32.mrb[0].mxu0
    %969 = vmatprep.mubr.f32.mxu0 0.0
    %970 = vmatmul.mubr.f32.gmra.mrb[0].mxu0 %v842
    %v971 = vpop.f32.mrb[0].mxu0
    %v972 = vadd.f32 %v815, %v971
    %v973 = vpop.f32.mrb[0].mxu0
    %974 = vmatprep.mubr.f32.mxu0 0.0
    %975 = vmatmul.mubr.f32.gmra.mrb[0].mxu0 %v845
    %v976 = vpop.f32.mrb[0].mxu0
    %v977 = vadd.f32 %v815, %v976
    %v978 = vpop.f32.mrb[0].mxu0
    %979 = vmatprep.mubr.f32.mxu0 0.0
    %980 = vmatmul.mubr.f32.gmra.mrb[0].mxu0 %v848
    %v981 = vpop.f32.mrb[0].mxu0
    %v982 = vadd.f32 %v815, %v981
    %v983 = vpop.f32.mrb[0].mxu0
    %984 = vmatprep.mubr.f32.mxu0 0.0
    %985 = vmatmul.mubr.f32.gmra.mrb[0].mxu0 %v851
    %v986 = vpop.f32.mrb[0].mxu0
    %v987 = vadd.f32 %v815, %v986
    %v988 = vpop.f32.mrb[0].mxu0
    %989 = vmatprep.mubr.f32.mxu0 0.0
    %990 = vmatmul.mubr.f32.gmra.mrb[0].mxu0 %v854
    %v991 = vpop.f32.mrb[0].mxu0
    %v992 = vadd.f32 %v815, %v991
    %v993 = vpop.f32.mrb[0].mxu0
    %994 = vmatprep.mubr.f32.mxu0 0.0
    %995 = vmatmul.mubr.f32.gmra.mrb[0].mxu0 %v857
    %v996 = vpop.f32.mrb[0].mxu0
    %v997 = vadd.f32 %v815, %v996
    %v998 = vpop.f32.mrb[0].mxu0
    %999 = vmatprep.mubr.f32.mxu0 0.0
    %1000 = vmatmul.mubr.f32.gmra.mrb[0].mxu0 %v860
    %v1001 = vpop.f32.mrb[0].mxu0
    %v1002 = vadd.f32 %v815, %v1001
    %v1003 = vpop.f32.mrb[0].mxu0
    %1004 = vmatprep.mubr.f32.mxu0 0.0
    %1005 = vmatmul.mubr.f32.gmra.mrb[0].mxu0 %v863
    %v1006 = vpop.f32.mrb[0].mxu0
    %v1007 = vadd.f32 %v815, %v1006
    %v1008 = vpop.f32.mrb[0].mxu0
    %1009 = vdwg.mxu0
    %v1010 = vmax.f32 %v932, 0.0
    %v1011 = vmax.f32 %v937, 0.0
    %v1012 = vmax.f32 %v942, 0.0
    %v1013 = vmax.f32 %v947, 0.0
    %v1014 = vmax.f32 %v952, 0.0
    %v1015 = vmax.f32 %v957, 0.0
    %v1016 = vmax.f32 %v962, 0.0
    %v1017 = vmax.f32 %v967, 0.0
    %v1018 = vmax.f32 %v972, 0.0
    %v1019 = vmax.f32 %v977, 0.0
    %v1020 = vmax.f32 %v982, 0.0
    %v1021 = vmax.f32 %v987, 0.0
    %v1022 = vmax.f32 %v992, 0.0
    %v1023 = vmax.f32 %v997, 0.0
    %v1024 = vmax.f32 %v1002, 0.0
    %v1025 = vmax.f32 %v1007, 0.0
    %v1026 = vadd.f32 %v253, %v1010
    %v1027 = vadd.f32 %v254, %v1011
    %v1028 = vadd.f32 %v255, %v1012
    %v1029 = vadd.f32 %v256, %v1013
    %v1030 = vadd.f32 %v257, %v1014
    %v1031 = vadd.f32 %v258, %v1015
    %v1032 = vadd.f32 %v259, %v1016
    %v1033 = vadd.f32 %v260, %v1017
    %v1034 = vadd.f32 %v261, %v1018
    %v1035 = vadd.f32 %v262, %v1019
    %v1036 = vadd.f32 %v263, %v1020
    %v1037 = vadd.f32 %v264, %v1021
    %v1038 = vadd.f32 %v265, %v1022
    %v1039 = vadd.f32 %v266, %v1023
    %v1040 = vadd.f32 %v267, %v1024
    %v1041 = vadd.f32 %v268, %v1025
    %s1042 = scalar_lea.vmem %s4, 32
    %v1043 = vld [vmem:[%s1042] sm:$0xff]
    %v1044 = vld [vmem:[%s1042 + $0x8] sm:$0xff]
    %v1045 = vld [vmem:[%s1042 + $0x10] sm:$0xff]
    %v1046 = vld [vmem:[%s1042 + $0x18] sm:$0xff]
    %s1047 = scalar_lea.vmem %s5, 1
    %v1048 = vld [vmem:[%s1047] sm:$0x1]
    %v1050 = vlaneseq
    %v1051 = vshrl.u32 %v1050, 7
    %v1052 = vsub.s32 0, %v1051
    %v1053 = vrot.slane %v1048, %v1052
    %v1056 = vsel %vm435, %v1026, 0
    %v1059 = vsel %vm435, %v1027, 0
    %v1062 = vsel %vm435, %v1028, 0
    %v1065 = vsel %vm435, %v1029, 0
    %v1068 = vsel %vm435, %v1030, 0
    %v1071 = vsel %vm435, %v1031, 0
    %v1074 = vsel %vm435, %v1032, 0
    %v1077 = vsel %vm435, %v1033, 0
    %v1080 = vsel %vm435, %v1034, 0
    %v1083 = vsel %vm435, %v1035, 0
    %v1086 = vsel %vm435, %v1036, 0
    %v1089 = vsel %vm435, %v1037, 0
    %v1092 = vsel %vm435, %v1038, 0
    %v1095 = vsel %vm435, %v1039, 0
    %v1098 = vsel %vm435, %v1040, 0
    %v1101 = vsel %vm435, %v1041, 0
    %1103 = vmatprep.subr.mxu0 0.0
    %1104 = vmatpush1.msra.mxu0 %v1043
    %1105 = vmatprep.subr.mxu0 0.0
    %1106 = vmatpush1.msra.mxu0 %v1044
    %1107 = vmatprep.subr.mxu0 0.0
    %1108 = vmatpush1.msra.mxu0 %v1045
    %1109 = vmatprep.subr.mxu0 0.0
    %1110 = vmatpush1.msra.mxu0 %v1046
    %1111 = vmatprep.subr.mxu0 0.0
    %1112 = vmatpush1.msra.mxu0 0.0
    %1113 = vmatprep.subr.mxu0 0.0
    %1114 = vmatpush1.msra.mxu0 0.0
    %1115 = vmatprep.subr.mxu0 0.0
    %1116 = vmatpush1.msra.mxu0 0.0
    %1117 = vmatprep.subr.mxu0 0.0
    %1118 = vmatpush1.msra.mxu0 0.0
    %1119 = vmatprep.subr.mxu0 0.0
    %1120 = vmatpush1.msra.mxu0 0.0
    %1121 = vmatprep.subr.mxu0 0.0
    %1122 = vmatpush1.msra.mxu0 0.0
    %1123 = vmatprep.subr.mxu0 0.0
    %1124 = vmatpush1.msra.mxu0 0.0
    %1125 = vmatprep.subr.mxu0 0.0
    %1126 = vmatpush1.msra.mxu0 0.0
    %1127 = vmatprep.subr.mxu0 0.0
    %1128 = vmatpush1.msra.mxu0 0.0
    %1129 = vmatprep.subr.mxu0 0.0
    %1130 = vmatpush1.msra.mxu0 0.0
    %1131 = vmatprep.subr.mxu0 0.0
    %1132 = vmatpush1.msra.mxu0 0.0
    %1133 = vmatprep.subr.mxu0 0.0
    %1134 = vmatpush1.msra.mxu0 0.0
    %1135 = vmatprep.subr.mxu0 0.0
    %1136 = vmatpush1.msra.mxu0 0.0
    %1137 = vmatprep.subr.mxu0 0.0
    %1138 = vmatpush1.msra.mxu0 0.0
    %1139 = vmatprep.subr.mxu0 0.0
    %1140 = vmatpush1.msra.mxu0 0.0
    %1141 = vmatprep.subr.mxu0 0.0
    %1142 = vmatpush1.msra.mxu0 0.0
    %1143 = vmatprep.subr.mxu0 0.0
    %1144 = vmatpush1.msra.mxu0 0.0
    %1145 = vmatprep.subr.mxu0 0.0
    %1146 = vmatpush1.msra.mxu0 0.0
    %1147 = vmatprep.subr.mxu0 0.0
    %1148 = vmatpush1.msra.mxu0 0.0
    %1149 = vmatprep.subr.mxu0 0.0
    %1150 = vmatpush1.msra.mxu0 0.0
    %1151 = vmatprep.subr.mxu0 0.0
    %1152 = vmatpush1.msra.mxu0 0.0
    %1153 = vmatprep.subr.mxu0 0.0
    %1154 = vmatpush1.msra.mxu0 0.0
    %1155 = vmatprep.subr.mxu0 0.0
    %1156 = vmatpush1.msra.mxu0 0.0
    %1157 = vmatprep.subr.mxu0 0.0
    %1158 = vmatpush1.msra.mxu0 0.0
    %1159 = vmatprep.subr.mxu0 0.0
    %1160 = vmatpush1.msra.mxu0 0.0
    %1161 = vmatprep.subr.mxu0 0.0
    %1162 = vmatpush1.msra.mxu0 0.0
    %1163 = vmatprep.subr.mxu0 0.0
    %1164 = vmatpush1.msra.mxu0 0.0
    %1165 = vmatprep.subr.mxu0 0.0
    %1166 = vmatpush1.msra.mxu0 0.0
    %1167 = vmatprep.mubr.f32.mxu0 0.0
    %1168 = vmatmul.mubr.f32.gmra.mrb[0].mxu0 %v1056
    %v1169 = vpop.f32.mrb[0].mxu0
    %v1170 = vadd.f32 %v1053, %v1169
    %v1171 = vpop.f32.mrb[0].mxu0
    %1172 = vmatprep.mubr.f32.mxu0 0.0
    %1173 = vmatmul.mubr.f32.gmra.mrb[0].mxu0 %v1059
    %v1174 = vpop.f32.mrb[0].mxu0
    %v1175 = vadd.f32 %v1053, %v1174
    %v1176 = vpop.f32.mrb[0].mxu0
    %1177 = vmatprep.mubr.f32.mxu0 0.0
    %1178 = vmatmul.mubr.f32.gmra.mrb[0].mxu0 %v1062
    %v1179 = vpop.f32.mrb[0].mxu0
    %v1180 = vadd.f32 %v1053, %v1179
    %v1181 = vpop.f32.mrb[0].mxu0
    %1182 = vmatprep.mubr.f32.mxu0 0.0
    %1183 = vmatmul.mubr.f32.gmra.mrb[0].mxu0 %v1065
    %v1184 = vpop.f32.mrb[0].mxu0
    %v1185 = vadd.f32 %v1053, %v1184
    %v1186 = vpop.f32.mrb[0].mxu0
    %1187 = vmatprep.mubr.f32.mxu0 0.0
    %1188 = vmatmul.mubr.f32.gmra.mrb[0].mxu0 %v1068
    %v1189 = vpop.f32.mrb[0].mxu0
    %v1190 = vadd.f32 %v1053, %v1189
    %v1191 = vpop.f32.mrb[0].mxu0
    %1192 = vmatprep.mubr.f32.mxu0 0.0
    %1193 = vmatmul.mubr.f32.gmra.mrb[0].mxu0 %v1071
    %v1194 = vpop.f32.mrb[0].mxu0
    %v1195 = vadd.f32 %v1053, %v1194
    %v1196 = vpop.f32.mrb[0].mxu0
    %1197 = vmatprep.mubr.f32.mxu0 0.0
    %1198 = vmatmul.mubr.f32.gmra.mrb[0].mxu0 %v1074
    %v1199 = vpop.f32.mrb[0].mxu0
    %v1200 = vadd.f32 %v1053, %v1199
    %v1201 = vpop.f32.mrb[0].mxu0
    %1202 = vmatprep.mubr.f32.mxu0 0.0
    %1203 = vmatmul.mubr.f32.gmra.mrb[0].mxu0 %v1077
    %v1204 = vpop.f32.mrb[0].mxu0
    %v1205 = vadd.f32 %v1053, %v1204
    %v1206 = vpop.f32.mrb[0].mxu0
    %1207 = vmatprep.mubr.f32.mxu0 0.0
    %1208 = vmatmul.mubr.f32.gmra.mrb[0].mxu0 %v1080
    %v1209 = vpop.f32.mrb[0].mxu0
    %v1210 = vadd.f32 %v1053, %v1209
    %v1211 = vpop.f32.mrb[0].mxu0
    %1212 = vmatprep.mubr.f32.mxu0 0.0
    %1213 = vmatmul.mubr.f32.gmra.mrb[0].mxu0 %v1083
    %v1214 = vpop.f32.mrb[0].mxu0
    %v1215 = vadd.f32 %v1053, %v1214
    %v1216 = vpop.f32.mrb[0].mxu0
    %1217 = vmatprep.mubr.f32.mxu0 0.0
    %1218 = vmatmul.mubr.f32.gmra.mrb[0].mxu0 %v1086
    %v1219 = vpop.f32.mrb[0].mxu0
    %v1220 = vadd.f32 %v1053, %v1219
    %v1221 = vpop.f32.mrb[0].mxu0
    %1222 = vmatprep.mubr.f32.mxu0 0.0
    %1223 = vmatmul.mubr.f32.gmra.mrb[0].mxu0 %v1089
    %v1224 = vpop.f32.mrb[0].mxu0
    %v1225 = vadd.f32 %v1053, %v1224
    %v1226 = vpop.f32.mrb[0].mxu0
    %1227 = vmatprep.mubr.f32.mxu0 0.0
    %1228 = vmatmul.mubr.f32.gmra.mrb[0].mxu0 %v1092
    %v1229 = vpop.f32.mrb[0].mxu0
    %v1230 = vadd.f32 %v1053, %v1229
    %v1231 = vpop.f32.mrb[0].mxu0
    %1232 = vmatprep.mubr.f32.mxu0 0.0
    %1233 = vmatmul.mubr.f32.gmra.mrb[0].mxu0 %v1095
    %v1234 = vpop.f32.mrb[0].mxu0
    %v1235 = vadd.f32 %v1053, %v1234
    %v1236 = vpop.f32.mrb[0].mxu0
    %1237 = vmatprep.mubr.f32.mxu0 0.0
    %1238 = vmatmul.mubr.f32.gmra.mrb[0].mxu0 %v1098
    %v1239 = vpop.f32.mrb[0].mxu0
    %v1240 = vadd.f32 %v1053, %v1239
    %v1241 = vpop.f32.mrb[0].mxu0
    %1242 = vmatprep.mubr.f32.mxu0 0.0
    %1243 = vmatmul.mubr.f32.gmra.mrb[0].mxu0 %v1101
    %v1244 = vpop.f32.mrb[0].mxu0
    %v1245 = vadd.f32 %v1053, %v1244
    %v1246 = vpop.f32.mrb[0].mxu0
    %1247 = vdwg.mxu0
    %v1248 = vmax.f32 %v1170, 0.0
    %v1249 = vmax.f32 %v1175, 0.0
    %v1250 = vmax.f32 %v1180, 0.0
    %v1251 = vmax.f32 %v1185, 0.0
    %v1252 = vmax.f32 %v1190, 0.0
    %v1253 = vmax.f32 %v1195, 0.0
    %v1254 = vmax.f32 %v1200, 0.0
    %v1255 = vmax.f32 %v1205, 0.0
    %v1256 = vmax.f32 %v1210, 0.0
    %v1257 = vmax.f32 %v1215, 0.0
    %v1258 = vmax.f32 %v1220, 0.0
    %v1259 = vmax.f32 %v1225, 0.0
    %v1260 = vmax.f32 %v1230, 0.0
    %v1261 = vmax.f32 %v1235, 0.0
    %v1262 = vmax.f32 %v1240, 0.0
    %v1263 = vmax.f32 %v1245, 0.0
    %1264 = vmatprep.subr.mxu0 0.0
    %1265 = vmatpush1.msra.mxu0 %v1248
    %1266 = vmatprep.subr.mxu0 0.0
    %1267 = vmatpush1.msra.mxu0 %v1249
    %1268 = vmatprep.subr.mxu0 0.0
    %1269 = vmatpush1.msra.mxu0 %v1250
    %1270 = vmatprep.subr.mxu0 0.0
    %1271 = vmatpush1.msra.mxu0 %v1251
    %1272 = vmatprep.subr.mxu0 0.0
    %1273 = vmatpush1.msra.mxu0 %v1252
    %1274 = vmatprep.subr.mxu0 0.0
    %1275 = vmatpush1.msra.mxu0 %v1253
    %1276 = vmatprep.subr.mxu0 0.0
    %1277 = vmatpush1.msra.mxu0 %v1254
    %1278 = vmatprep.subr.mxu0 0.0
    %1279 = vmatpush1.msra.mxu0 %v1255
    %1280 = vmatprep.subr.mxu0 0.0
    %1281 = vmatpush1.msra.mxu0 %v1256
    %1282 = vmatprep.subr.mxu0 0.0
    %1283 = vmatpush1.msra.mxu0 %v1257
    %1284 = vmatprep.subr.mxu0 0.0
    %1285 = vmatpush1.msra.mxu0 %v1258
    %1286 = vmatprep.subr.mxu0 0.0
    %1287 = vmatpush1.msra.mxu0 %v1259
    %1288 = vmatprep.subr.mxu0 0.0
    %1289 = vmatpush1.msra.mxu0 %v1260
    %1290 = vmatprep.subr.mxu0 0.0
    %1291 = vmatpush1.msra.mxu0 %v1261
    %1292 = vmatprep.subr.mxu0 0.0
    %1293 = vmatpush1.msra.mxu0 %v1262
    %1294 = vmatprep.subr.mxu0 0.0
    %1295 = vmatpush1.msra.mxu0 %v1263
    %1296 = vmatprep.subr.mxu0 0.0
    %1297 = vmatpush1.msra.mxu0 0.0
    %1298 = vmatprep.subr.mxu0 0.0
    %1299 = vmatpush1.msra.mxu0 0.0
    %1300 = vmatprep.subr.mxu0 0.0
    %1301 = vmatpush1.msra.mxu0 0.0
    %1302 = vmatprep.subr.mxu0 0.0
    %1303 = vmatpush1.msra.mxu0 0.0
    %1304 = vmatprep.subr.mxu0 0.0
    %1305 = vmatpush1.msra.mxu0 0.0
    %1306 = vmatprep.subr.mxu0 0.0
    %1307 = vmatpush1.msra.mxu0 0.0
    %1308 = vmatprep.subr.mxu0 0.0
    %1309 = vmatpush1.msra.mxu0 0.0
    %1310 = vmatprep.subr.mxu0 0.0
    %1311 = vmatpush1.msra.mxu0 0.0
    %1312 = vmatprep.subr.mxu0 0.0
    %1313 = vmatpush1.msra.mxu0 0.0
    %1314 = vmatprep.subr.mxu0 0.0
    %1315 = vmatpush1.msra.mxu0 0.0
    %1316 = vmatprep.subr.mxu0 0.0
    %1317 = vmatpush1.msra.mxu0 0.0
    %1318 = vmatprep.subr.mxu0 0.0
    %1319 = vmatpush1.msra.mxu0 0.0
    %1320 = vmatprep.subr.mxu0 0.0
    %1321 = vmatpush1.msra.mxu0 0.0
    %1322 = vmatprep.subr.mxu0 0.0
    %1323 = vmatpush1.msra.mxu0 0.0
    %1324 = vmatprep.subr.mxu0 0.0
    %1325 = vmatpush1.msra.mxu0 0.0
    %1326 = vmatprep.subr.mxu0 0.0
    %1327 = vmatpush1.msra.mxu0 0.0
    %1328 = vmatprep.mubr.f32.mxu0 0.0
    %1329 = vmatmul.mubr.f32.gmra.mrb[0].mxu0 %v645
    %v1330 = vpop.f32.mrb[0].mxu0
    %v1331 = vadd.f32 0.0, %v1330
    %v1332 = vpop.f32.mrb[0].mxu0
    %1333 = vmatprep.mubr.f32.mxu0 0.0
    %1334 = vmatmul.mubr.f32.gmra.mrb[0].mxu0 %v646
    %v1335 = vpop.f32.mrb[0].mxu0
    %v1336 = vadd.f32 0.0, %v1335
    %v1337 = vpop.f32.mrb[0].mxu0
    %1338 = vmatprep.mubr.f32.mxu0 0.0
    %1339 = vmatmul.mubr.f32.gmra.mrb[0].mxu0 %v647
    %v1340 = vpop.f32.mrb[0].mxu0
    %v1341 = vadd.f32 0.0, %v1340
    %v1342 = vpop.f32.mrb[0].mxu0
    %1343 = vmatprep.mubr.f32.mxu0 0.0
    %1344 = vmatmul.mubr.f32.gmra.mrb[0].mxu0 %v648
    %v1345 = vpop.f32.mrb[0].mxu0
    %v1346 = vadd.f32 0.0, %v1345
    %v1347 = vpop.f32.mrb[0].mxu0
    %1348 = vmatprep.mubr.f32.mxu0 0.0
    %1349 = vmatmul.mubr.f32.gmra.mrb[0].mxu0 %v649
    %v1350 = vpop.f32.mrb[0].mxu0
    %v1351 = vadd.f32 0.0, %v1350
    %v1352 = vpop.f32.mrb[0].mxu0
    %1353 = vmatprep.mubr.f32.mxu0 0.0
    %1354 = vmatmul.mubr.f32.gmra.mrb[0].mxu0 %v650
    %v1355 = vpop.f32.mrb[0].mxu0
    %v1356 = vadd.f32 0.0, %v1355
    %v1357 = vpop.f32.mrb[0].mxu0
    %1358 = vmatprep.mubr.f32.mxu0 0.0
    %1359 = vmatmul.mubr.f32.gmra.mrb[0].mxu0 %v651
    %v1360 = vpop.f32.mrb[0].mxu0
    %v1361 = vadd.f32 0.0, %v1360
    %v1362 = vpop.f32.mrb[0].mxu0
    %1363 = vmatprep.mubr.f32.mxu0 0.0
    %1364 = vmatmul.mubr.f32.gmra.mrb[0].mxu0 %v652
    %v1365 = vpop.f32.mrb[0].mxu0
    %v1366 = vadd.f32 0.0, %v1365
    %v1367 = vpop.f32.mrb[0].mxu0
    %1368 = vmatprep.mubr.f32.mxu0 0.0
    %1369 = vmatmul.mubr.f32.gmra.mrb[0].mxu0 %v653
    %v1370 = vpop.f32.mrb[0].mxu0
    %v1371 = vadd.f32 0.0, %v1370
    %v1372 = vpop.f32.mrb[0].mxu0
    %1373 = vmatprep.mubr.f32.mxu0 0.0
    %1374 = vmatmul.mubr.f32.gmra.mrb[0].mxu0 %v654
    %v1375 = vpop.f32.mrb[0].mxu0
    %v1376 = vadd.f32 0.0, %v1375
    %v1377 = vpop.f32.mrb[0].mxu0
    %1378 = vmatprep.mubr.f32.mxu0 0.0
    %1379 = vmatmul.mubr.f32.gmra.mrb[0].mxu0 %v655
    %v1380 = vpop.f32.mrb[0].mxu0
    %v1381 = vadd.f32 0.0, %v1380
    %v1382 = vpop.f32.mrb[0].mxu0
    %1383 = vmatprep.mubr.f32.mxu0 0.0
    %1384 = vmatmul.mubr.f32.gmra.mrb[0].mxu0 %v656
    %v1385 = vpop.f32.mrb[0].mxu0
    %v1386 = vadd.f32 0.0, %v1385
    %v1387 = vpop.f32.mrb[0].mxu0
    %1388 = vmatprep.mubr.f32.mxu0 0.0
    %1389 = vmatmul.mubr.f32.gmra.mrb[0].mxu0 %v657
    %v1390 = vpop.f32.mrb[0].mxu0
    %v1391 = vadd.f32 0.0, %v1390
    %v1392 = vpop.f32.mrb[0].mxu0
    %1393 = vmatprep.mubr.f32.mxu0 0.0
    %1394 = vmatmul.mubr.f32.gmra.mrb[0].mxu0 %v658
    %v1395 = vpop.f32.mrb[0].mxu0
    %v1396 = vadd.f32 0.0, %v1395
    %v1397 = vpop.f32.mrb[0].mxu0
    %1398 = vmatprep.mubr.f32.mxu0 0.0
    %1399 = vmatmul.mubr.f32.gmra.mrb[0].mxu0 %v659
    %v1400 = vpop.f32.mrb[0].mxu0
    %v1401 = vadd.f32 0.0, %v1400
    %v1402 = vpop.f32.mrb[0].mxu0
    %1403 = vmatprep.mubr.f32.mxu0 0.0
    %1404 = vmatmul.mubr.f32.gmra.mrb[0].mxu0 %v660
    %v1405 = vpop.f32.mrb[0].mxu0
    %v1406 = vadd.f32 0.0, %v1405
    %v1407 = vpop.f32.mrb[0].mxu0
    %1408 = vdwg.mxu0
    %s1409 = scalar_lea.vmem %s6, 32
    %v1410 = vld [vmem:[%s1409] sm:$0xff]
    %v1411 = vld [vmem:[%s1409 + $0x8] sm:$0xff]
    %v1412 = vld [vmem:[%s1409 + $0x10] sm:$0xff]
    %v1413 = vld [vmem:[%s1409 + $0x18] sm:$0xff]
    %s1414 = scalar_lea.vmem %s7, 1
    %v1415 = vld [vmem:[%s1414] sm:$0x1]
    %v1417 = vlaneseq
    %v1418 = vshrl.u32 %v1417, 7
    %v1419 = vsub.s32 0, %v1418
    %v1420 = vrot.slane %v1415, %v1419
    %v1423 = vsel %vm435, %v1331, 0
    %v1426 = vsel %vm435, %v1336, 0
    %v1429 = vsel %vm435, %v1341, 0
    %v1432 = vsel %vm435, %v1346, 0
    %v1435 = vsel %vm435, %v1351, 0
    %v1438 = vsel %vm435, %v1356, 0
    %v1441 = vsel %vm435, %v1361, 0
    %v1444 = vsel %vm435, %v1366, 0
    %v1447 = vsel %vm435, %v1371, 0
    %v1450 = vsel %vm435, %v1376, 0
    %v1453 = vsel %vm435, %v1381, 0
    %v1456 = vsel %vm435, %v1386, 0
    %v1459 = vsel %vm435, %v1391, 0
    %v1462 = vsel %vm435, %v1396, 0
    %v1465 = vsel %vm435, %v1401, 0
    %v1468 = vsel %vm435, %v1406, 0
    %1470 = vmatprep.subr.mxu0 0.0
    %1471 = vmatpush1.msra.mxu0 %v1410
    %1472 = vmatprep.subr.mxu0 0.0
    %1473 = vmatpush1.msra.mxu0 %v1411
    %1474 = vmatprep.subr.mxu0 0.0
    %1475 = vmatpush1.msra.mxu0 %v1412
    %1476 = vmatprep.subr.mxu0 0.0
    %1477 = vmatpush1.msra.mxu0 %v1413
    %1478 = vmatprep.subr.mxu0 0.0
    %1479 = vmatpush1.msra.mxu0 0.0
    %1480 = vmatprep.subr.mxu0 0.0
    %1481 = vmatpush1.msra.mxu0 0.0
    %1482 = vmatprep.subr.mxu0 0.0
    %1483 = vmatpush1.msra.mxu0 0.0
    %1484 = vmatprep.subr.mxu0 0.0
    %1485 = vmatpush1.msra.mxu0 0.0
    %1486 = vmatprep.subr.mxu0 0.0
    %1487 = vmatpush1.msra.mxu0 0.0
    %1488 = vmatprep.subr.mxu0 0.0
    %1489 = vmatpush1.msra.mxu0 0.0
    %1490 = vmatprep.subr.mxu0 0.0
    %1491 = vmatpush1.msra.mxu0 0.0
    %1492 = vmatprep.subr.mxu0 0.0
    %1493 = vmatpush1.msra.mxu0 0.0
    %1494 = vmatprep.subr.mxu0 0.0
    %1495 = vmatpush1.msra.mxu0 0.0
    %1496 = vmatprep.subr.mxu0 0.0
    %1497 = vmatpush1.msra.mxu0 0.0
    %1498 = vmatprep.subr.mxu0 0.0
    %1499 = vmatpush1.msra.mxu0 0.0
    %1500 = vmatprep.subr.mxu0 0.0
    %1501 = vmatpush1.msra.mxu0 0.0
    %1502 = vmatprep.subr.mxu0 0.0
    %1503 = vmatpush1.msra.mxu0 0.0
    %1504 = vmatprep.subr.mxu0 0.0
    %1505 = vmatpush1.msra.mxu0 0.0
    %1506 = vmatprep.subr.mxu0 0.0
    %1507 = vmatpush1.msra.mxu0 0.0
    %1508 = vmatprep.subr.mxu0 0.0
    %1509 = vmatpush1.msra.mxu0 0.0
    %1510 = vmatprep.subr.mxu0 0.0
    %1511 = vmatpush1.msra.mxu0 0.0
    %1512 = vmatprep.subr.mxu0 0.0
    %1513 = vmatpush1.msra.mxu0 0.0
    %1514 = vmatprep.subr.mxu0 0.0
    %1515 = vmatpush1.msra.mxu0 0.0
    %1516 = vmatprep.subr.mxu0 0.0
    %1517 = vmatpush1.msra.mxu0 0.0
    %1518 = vmatprep.subr.mxu0 0.0
    %1519 = vmatpush1.msra.mxu0 0.0
    %1520 = vmatprep.subr.mxu0 0.0
    %1521 = vmatpush1.msra.mxu0 0.0
    %1522 = vmatprep.subr.mxu0 0.0
    %1523 = vmatpush1.msra.mxu0 0.0
    %1524 = vmatprep.subr.mxu0 0.0
    %1525 = vmatpush1.msra.mxu0 0.0
    %1526 = vmatprep.subr.mxu0 0.0
    %1527 = vmatpush1.msra.mxu0 0.0
    %1528 = vmatprep.subr.mxu0 0.0
    %1529 = vmatpush1.msra.mxu0 0.0
    %1530 = vmatprep.subr.mxu0 0.0
    %1531 = vmatpush1.msra.mxu0 0.0
    %1532 = vmatprep.subr.mxu0 0.0
    %1533 = vmatpush1.msra.mxu0 0.0
    %1534 = vmatprep.mubr.f32.mxu0 0.0
    %1535 = vmatmul.mubr.f32.gmra.mrb[0].mxu0 %v1423
    %v1536 = vpop.f32.mrb[0].mxu0
    %v1537 = vadd.f32 %v1420, %v1536
    %v1538 = vpop.f32.mrb[0].mxu0
    %1539 = vmatprep.mubr.f32.mxu0 0.0
    %1540 = vmatmul.mubr.f32.gmra.mrb[0].mxu0 %v1426
    %v1541 = vpop.f32.mrb[0].mxu0
    %v1542 = vadd.f32 %v1420, %v1541
    %v1543 = vpop.f32.mrb[0].mxu0
    %1544 = vmatprep.mubr.f32.mxu0 0.0
    %1545 = vmatmul.mubr.f32.gmra.mrb[0].mxu0 %v1429
    %v1546 = vpop.f32.mrb[0].mxu0
    %v1547 = vadd.f32 %v1420, %v1546
    %v1548 = vpop.f32.mrb[0].mxu0
    %1549 = vmatprep.mubr.f32.mxu0 0.0
    %1550 = vmatmul.mubr.f32.gmra.mrb[0].mxu0 %v1432
    %v1551 = vpop.f32.mrb[0].mxu0
    %v1552 = vadd.f32 %v1420, %v1551
    %v1553 = vpop.f32.mrb[0].mxu0
    %1554 = vmatprep.mubr.f32.mxu0 0.0
    %1555 = vmatmul.mubr.f32.gmra.mrb[0].mxu0 %v1435
    %v1556 = vpop.f32.mrb[0].mxu0
    %v1557 = vadd.f32 %v1420, %v1556
    %v1558 = vpop.f32.mrb[0].mxu0
    %1559 = vmatprep.mubr.f32.mxu0 0.0
    %1560 = vmatmul.mubr.f32.gmra.mrb[0].mxu0 %v1438
    %v1561 = vpop.f32.mrb[0].mxu0
    %v1562 = vadd.f32 %v1420, %v1561
    %v1563 = vpop.f32.mrb[0].mxu0
    %1564 = vmatprep.mubr.f32.mxu0 0.0
    %1565 = vmatmul.mubr.f32.gmra.mrb[0].mxu0 %v1441
    %v1566 = vpop.f32.mrb[0].mxu0
    %v1567 = vadd.f32 %v1420, %v1566
    %v1568 = vpop.f32.mrb[0].mxu0
    %1569 = vmatprep.mubr.f32.mxu0 0.0
    %1570 = vmatmul.mubr.f32.gmra.mrb[0].mxu0 %v1444
    %v1571 = vpop.f32.mrb[0].mxu0
    %v1572 = vadd.f32 %v1420, %v1571
    %v1573 = vpop.f32.mrb[0].mxu0
    %1574 = vmatprep.mubr.f32.mxu0 0.0
    %1575 = vmatmul.mubr.f32.gmra.mrb[0].mxu0 %v1447
    %v1576 = vpop.f32.mrb[0].mxu0
    %v1577 = vadd.f32 %v1420, %v1576
    %v1578 = vpop.f32.mrb[0].mxu0
    %1579 = vmatprep.mubr.f32.mxu0 0.0
    %1580 = vmatmul.mubr.f32.gmra.mrb[0].mxu0 %v1450
    %v1581 = vpop.f32.mrb[0].mxu0
    %v1582 = vadd.f32 %v1420, %v1581
    %v1583 = vpop.f32.mrb[0].mxu0
    %1584 = vmatprep.mubr.f32.mxu0 0.0
    %1585 = vmatmul.mubr.f32.gmra.mrb[0].mxu0 %v1453
    %v1586 = vpop.f32.mrb[0].mxu0
    %v1587 = vadd.f32 %v1420, %v1586
    %v1588 = vpop.f32.mrb[0].mxu0
    %1589 = vmatprep.mubr.f32.mxu0 0.0
    %1590 = vmatmul.mubr.f32.gmra.mrb[0].mxu0 %v1456
    %v1591 = vpop.f32.mrb[0].mxu0
    %v1592 = vadd.f32 %v1420, %v1591
    %v1593 = vpop.f32.mrb[0].mxu0
    %1594 = vmatprep.mubr.f32.mxu0 0.0
    %1595 = vmatmul.mubr.f32.gmra.mrb[0].mxu0 %v1459
    %v1596 = vpop.f32.mrb[0].mxu0
    %v1597 = vadd.f32 %v1420, %v1596
    %v1598 = vpop.f32.mrb[0].mxu0
    %1599 = vmatprep.mubr.f32.mxu0 0.0
    %1600 = vmatmul.mubr.f32.gmra.mrb[0].mxu0 %v1462
    %v1601 = vpop.f32.mrb[0].mxu0
    %v1602 = vadd.f32 %v1420, %v1601
    %v1603 = vpop.f32.mrb[0].mxu0
    %1604 = vmatprep.mubr.f32.mxu0 0.0
    %1605 = vmatmul.mubr.f32.gmra.mrb[0].mxu0 %v1465
    %v1606 = vpop.f32.mrb[0].mxu0
    %v1607 = vadd.f32 %v1420, %v1606
    %v1608 = vpop.f32.mrb[0].mxu0
    %1609 = vmatprep.mubr.f32.mxu0 0.0
    %1610 = vmatmul.mubr.f32.gmra.mrb[0].mxu0 %v1468
    %v1611 = vpop.f32.mrb[0].mxu0
    %v1612 = vadd.f32 %v1420, %v1611
    %v1613 = vpop.f32.mrb[0].mxu0
    %1614 = vdwg.mxu0
    %v1615 = vmax.f32 %v1537, 0.0
    %v1616 = vmax.f32 %v1542, 0.0
    %v1617 = vmax.f32 %v1547, 0.0
    %v1618 = vmax.f32 %v1552, 0.0
    %v1619 = vmax.f32 %v1557, 0.0
    %v1620 = vmax.f32 %v1562, 0.0
    %v1621 = vmax.f32 %v1567, 0.0
    %v1622 = vmax.f32 %v1572, 0.0
    %v1623 = vmax.f32 %v1577, 0.0
    %v1624 = vmax.f32 %v1582, 0.0
    %v1625 = vmax.f32 %v1587, 0.0
    %v1626 = vmax.f32 %v1592, 0.0
    %v1627 = vmax.f32 %v1597, 0.0
    %v1628 = vmax.f32 %v1602, 0.0
    %v1629 = vmax.f32 %v1607, 0.0
    %v1630 = vmax.f32 %v1612, 0.0
    %v1631 = vadd.f32 %v1026, %v1615
    %v1632 = vadd.f32 %v1027, %v1616
    %v1633 = vadd.f32 %v1028, %v1617
    %v1634 = vadd.f32 %v1029, %v1618
    %v1635 = vadd.f32 %v1030, %v1619
    %v1636 = vadd.f32 %v1031, %v1620
    %v1637 = vadd.f32 %v1032, %v1621
    %v1638 = vadd.f32 %v1033, %v1622
    %v1639 = vadd.f32 %v1034, %v1623
    %v1640 = vadd.f32 %v1035, %v1624
    %v1641 = vadd.f32 %v1036, %v1625
    %v1642 = vadd.f32 %v1037, %v1626
    %v1643 = vadd.f32 %v1038, %v1627
    %v1644 = vadd.f32 %v1039, %v1628
    %v1645 = vadd.f32 %v1040, %v1629
    %v1646 = vadd.f32 %v1041, %v1630
    %s1647 = scalar_lea.vmem %s4, 64
    %v1648 = vld [vmem:[%s1647] sm:$0xff]
    %v1649 = vld [vmem:[%s1647 + $0x8] sm:$0xff]
    %v1650 = vld [vmem:[%s1647 + $0x10] sm:$0xff]
    %v1651 = vld [vmem:[%s1647 + $0x18] sm:$0xff]
    %s1652 = scalar_lea.vmem %s5, 2
    %v1653 = vld [vmem:[%s1652] sm:$0x1]
    %v1655 = vlaneseq
    %v1656 = vshrl.u32 %v1655, 7
    %v1657 = vsub.s32 0, %v1656
    %v1658 = vrot.slane %v1653, %v1657
    %v1661 = vsel %vm435, %v1631, 0
    %v1664 = vsel %vm435, %v1632, 0
    %v1667 = vsel %vm435, %v1633, 0
    %v1670 = vsel %vm435, %v1634, 0
    %v1673 = vsel %vm435, %v1635, 0
    %v1676 = vsel %vm435, %v1636, 0
    %v1679 = vsel %vm435, %v1637, 0
    %v1682 = vsel %vm435, %v1638, 0
    %v1685 = vsel %vm435, %v1639, 0
    %v1688 = vsel %vm435, %v1640, 0
    %v1691 = vsel %vm435, %v1641, 0
    %v1694 = vsel %vm435, %v1642, 0
    %v1697 = vsel %vm435, %v1643, 0
    %v1700 = vsel %vm435, %v1644, 0
    %v1703 = vsel %vm435, %v1645, 0
    %v1706 = vsel %vm435, %v1646, 0
    %1708 = vmatprep.subr.mxu0 0.0
    %1709 = vmatpush1.msra.mxu0 %v1648
    %1710 = vmatprep.subr.mxu0 0.0
    %1711 = vmatpush1.msra.mxu0 %v1649
    %1712 = vmatprep.subr.mxu0 0.0
    %1713 = vmatpush1.msra.mxu0 %v1650
    %1714 = vmatprep.subr.mxu0 0.0
    %1715 = vmatpush1.msra.mxu0 %v1651
    %1716 = vmatprep.subr.mxu0 0.0
    %1717 = vmatpush1.msra.mxu0 0.0
    %1718 = vmatprep.subr.mxu0 0.0
    %1719 = vmatpush1.msra.mxu0 0.0
    %1720 = vmatprep.subr.mxu0 0.0
    %1721 = vmatpush1.msra.mxu0 0.0
    %1722 = vmatprep.subr.mxu0 0.0
    %1723 = vmatpush1.msra.mxu0 0.0
    %1724 = vmatprep.subr.mxu0 0.0
    %1725 = vmatpush1.msra.mxu0 0.0
    %1726 = vmatprep.subr.mxu0 0.0
    %1727 = vmatpush1.msra.mxu0 0.0
    %1728 = vmatprep.subr.mxu0 0.0
    %1729 = vmatpush1.msra.mxu0 0.0
    %1730 = vmatprep.subr.mxu0 0.0
    %1731 = vmatpush1.msra.mxu0 0.0
    %1732 = vmatprep.subr.mxu0 0.0
    %1733 = vmatpush1.msra.mxu0 0.0
    %1734 = vmatprep.subr.mxu0 0.0
    %1735 = vmatpush1.msra.mxu0 0.0
    %1736 = vmatprep.subr.mxu0 0.0
    %1737 = vmatpush1.msra.mxu0 0.0
    %1738 = vmatprep.subr.mxu0 0.0
    %1739 = vmatpush1.msra.mxu0 0.0
    %1740 = vmatprep.subr.mxu0 0.0
    %1741 = vmatpush1.msra.mxu0 0.0
    %1742 = vmatprep.subr.mxu0 0.0
    %1743 = vmatpush1.msra.mxu0 0.0
    %1744 = vmatprep.subr.mxu0 0.0
    %1745 = vmatpush1.msra.mxu0 0.0
    %1746 = vmatprep.subr.mxu0 0.0
    %1747 = vmatpush1.msra.mxu0 0.0
    %1748 = vmatprep.subr.mxu0 0.0
    %1749 = vmatpush1.msra.mxu0 0.0
    %1750 = vmatprep.subr.mxu0 0.0
    %1751 = vmatpush1.msra.mxu0 0.0
    %1752 = vmatprep.subr.mxu0 0.0
    %1753 = vmatpush1.msra.mxu0 0.0
    %1754 = vmatprep.subr.mxu0 0.0
    %1755 = vmatpush1.msra.mxu0 0.0
    %1756 = vmatprep.subr.mxu0 0.0
    %1757 = vmatpush1.msra.mxu0 0.0
    %1758 = vmatprep.subr.mxu0 0.0
    %1759 = vmatpush1.msra.mxu0 0.0
    %1760 = vmatprep.subr.mxu0 0.0
    %1761 = vmatpush1.msra.mxu0 0.0
    %1762 = vmatprep.subr.mxu0 0.0
    %1763 = vmatpush1.msra.mxu0 0.0
    %1764 = vmatprep.subr.mxu0 0.0
    %1765 = vmatpush1.msra.mxu0 0.0
    %1766 = vmatprep.subr.mxu0 0.0
    %1767 = vmatpush1.msra.mxu0 0.0
    %1768 = vmatprep.subr.mxu0 0.0
    %1769 = vmatpush1.msra.mxu0 0.0
    %1770 = vmatprep.subr.mxu0 0.0
    %1771 = vmatpush1.msra.mxu0 0.0
    %1772 = vmatprep.mubr.f32.mxu0 0.0
    %1773 = vmatmul.mubr.f32.gmra.mrb[0].mxu0 %v1661
    %v1774 = vpop.f32.mrb[0].mxu0
    %v1775 = vadd.f32 %v1658, %v1774
    %v1776 = vpop.f32.mrb[0].mxu0
    %1777 = vmatprep.mubr.f32.mxu0 0.0
    %1778 = vmatmul.mubr.f32.gmra.mrb[0].mxu0 %v1664
    %v1779 = vpop.f32.mrb[0].mxu0
    %v1780 = vadd.f32 %v1658, %v1779
    %v1781 = vpop.f32.mrb[0].mxu0
    %1782 = vmatprep.mubr.f32.mxu0 0.0
    %1783 = vmatmul.mubr.f32.gmra.mrb[0].mxu0 %v1667
    %v1784 = vpop.f32.mrb[0].mxu0
    %v1785 = vadd.f32 %v1658, %v1784
    %v1786 = vpop.f32.mrb[0].mxu0
    %1787 = vmatprep.mubr.f32.mxu0 0.0
    %1788 = vmatmul.mubr.f32.gmra.mrb[0].mxu0 %v1670
    %v1789 = vpop.f32.mrb[0].mxu0
    %v1790 = vadd.f32 %v1658, %v1789
    %v1791 = vpop.f32.mrb[0].mxu0
    %1792 = vmatprep.mubr.f32.mxu0 0.0
    %1793 = vmatmul.mubr.f32.gmra.mrb[0].mxu0 %v1673
    %v1794 = vpop.f32.mrb[0].mxu0
    %v1795 = vadd.f32 %v1658, %v1794
    %v1796 = vpop.f32.mrb[0].mxu0
    %1797 = vmatprep.mubr.f32.mxu0 0.0
    %1798 = vmatmul.mubr.f32.gmra.mrb[0].mxu0 %v1676
    %v1799 = vpop.f32.mrb[0].mxu0
    %v1800 = vadd.f32 %v1658, %v1799
    %v1801 = vpop.f32.mrb[0].mxu0
    %1802 = vmatprep.mubr.f32.mxu0 0.0
    %1803 = vmatmul.mubr.f32.gmra.mrb[0].mxu0 %v1679
    %v1804 = vpop.f32.mrb[0].mxu0
    %v1805 = vadd.f32 %v1658, %v1804
    %v1806 = vpop.f32.mrb[0].mxu0
    %1807 = vmatprep.mubr.f32.mxu0 0.0
    %1808 = vmatmul.mubr.f32.gmra.mrb[0].mxu0 %v1682
    %v1809 = vpop.f32.mrb[0].mxu0
    %v1810 = vadd.f32 %v1658, %v1809
    %v1811 = vpop.f32.mrb[0].mxu0
    %1812 = vmatprep.mubr.f32.mxu0 0.0
    %1813 = vmatmul.mubr.f32.gmra.mrb[0].mxu0 %v1685
    %v1814 = vpop.f32.mrb[0].mxu0
    %v1815 = vadd.f32 %v1658, %v1814
    %v1816 = vpop.f32.mrb[0].mxu0
    %1817 = vmatprep.mubr.f32.mxu0 0.0
    %1818 = vmatmul.mubr.f32.gmra.mrb[0].mxu0 %v1688
    %v1819 = vpop.f32.mrb[0].mxu0
    %v1820 = vadd.f32 %v1658, %v1819
    %v1821 = vpop.f32.mrb[0].mxu0
    %1822 = vmatprep.mubr.f32.mxu0 0.0
    %1823 = vmatmul.mubr.f32.gmra.mrb[0].mxu0 %v1691
    %v1824 = vpop.f32.mrb[0].mxu0
    %v1825 = vadd.f32 %v1658, %v1824
    %v1826 = vpop.f32.mrb[0].mxu0
    %1827 = vmatprep.mubr.f32.mxu0 0.0
    %1828 = vmatmul.mubr.f32.gmra.mrb[0].mxu0 %v1694
    %v1829 = vpop.f32.mrb[0].mxu0
    %v1830 = vadd.f32 %v1658, %v1829
    %v1831 = vpop.f32.mrb[0].mxu0
    %1832 = vmatprep.mubr.f32.mxu0 0.0
    %1833 = vmatmul.mubr.f32.gmra.mrb[0].mxu0 %v1697
    %v1834 = vpop.f32.mrb[0].mxu0
    %v1835 = vadd.f32 %v1658, %v1834
    %v1836 = vpop.f32.mrb[0].mxu0
    %1837 = vmatprep.mubr.f32.mxu0 0.0
    %1838 = vmatmul.mubr.f32.gmra.mrb[0].mxu0 %v1700
    %v1839 = vpop.f32.mrb[0].mxu0
    %v1840 = vadd.f32 %v1658, %v1839
    %v1841 = vpop.f32.mrb[0].mxu0
    %1842 = vmatprep.mubr.f32.mxu0 0.0
    %1843 = vmatmul.mubr.f32.gmra.mrb[0].mxu0 %v1703
    %v1844 = vpop.f32.mrb[0].mxu0
    %v1845 = vadd.f32 %v1658, %v1844
    %v1846 = vpop.f32.mrb[0].mxu0
    %1847 = vmatprep.mubr.f32.mxu0 0.0
    %1848 = vmatmul.mubr.f32.gmra.mrb[0].mxu0 %v1706
    %v1849 = vpop.f32.mrb[0].mxu0
    %v1850 = vadd.f32 %v1658, %v1849
    %v1851 = vpop.f32.mrb[0].mxu0
    %1852 = vdwg.mxu0
    %v1853 = vmax.f32 %v1775, 0.0
    %v1854 = vmax.f32 %v1780, 0.0
    %v1855 = vmax.f32 %v1785, 0.0
    %v1856 = vmax.f32 %v1790, 0.0
    %v1857 = vmax.f32 %v1795, 0.0
    %v1858 = vmax.f32 %v1800, 0.0
    %v1859 = vmax.f32 %v1805, 0.0
    %v1860 = vmax.f32 %v1810, 0.0
    %v1861 = vmax.f32 %v1815, 0.0
    %v1862 = vmax.f32 %v1820, 0.0
    %v1863 = vmax.f32 %v1825, 0.0
    %v1864 = vmax.f32 %v1830, 0.0
    %v1865 = vmax.f32 %v1835, 0.0
    %v1866 = vmax.f32 %v1840, 0.0
    %v1867 = vmax.f32 %v1845, 0.0
    %v1868 = vmax.f32 %v1850, 0.0
    %1869 = vmatprep.subr.mxu0 0.0
    %1870 = vmatpush1.msra.mxu0 %v1853
    %1871 = vmatprep.subr.mxu0 0.0
    %1872 = vmatpush1.msra.mxu0 %v1854
    %1873 = vmatprep.subr.mxu0 0.0
    %1874 = vmatpush1.msra.mxu0 %v1855
    %1875 = vmatprep.subr.mxu0 0.0
    %1876 = vmatpush1.msra.mxu0 %v1856
    %1877 = vmatprep.subr.mxu0 0.0
    %1878 = vmatpush1.msra.mxu0 %v1857
    %1879 = vmatprep.subr.mxu0 0.0
    %1880 = vmatpush1.msra.mxu0 %v1858
    %1881 = vmatprep.subr.mxu0 0.0
    %1882 = vmatpush1.msra.mxu0 %v1859
    %1883 = vmatprep.subr.mxu0 0.0
    %1884 = vmatpush1.msra.mxu0 %v1860
    %1885 = vmatprep.subr.mxu0 0.0
    %1886 = vmatpush1.msra.mxu0 %v1861
    %1887 = vmatprep.subr.mxu0 0.0
    %1888 = vmatpush1.msra.mxu0 %v1862
    %1889 = vmatprep.subr.mxu0 0.0
    %1890 = vmatpush1.msra.mxu0 %v1863
    %1891 = vmatprep.subr.mxu0 0.0
    %1892 = vmatpush1.msra.mxu0 %v1864
    %1893 = vmatprep.subr.mxu0 0.0
    %1894 = vmatpush1.msra.mxu0 %v1865
    %1895 = vmatprep.subr.mxu0 0.0
    %1896 = vmatpush1.msra.mxu0 %v1866
    %1897 = vmatprep.subr.mxu0 0.0
    %1898 = vmatpush1.msra.mxu0 %v1867
    %1899 = vmatprep.subr.mxu0 0.0
    %1900 = vmatpush1.msra.mxu0 %v1868
    %1901 = vmatprep.subr.mxu0 0.0
    %1902 = vmatpush1.msra.mxu0 0.0
    %1903 = vmatprep.subr.mxu0 0.0
    %1904 = vmatpush1.msra.mxu0 0.0
    %1905 = vmatprep.subr.mxu0 0.0
    %1906 = vmatpush1.msra.mxu0 0.0
    %1907 = vmatprep.subr.mxu0 0.0
    %1908 = vmatpush1.msra.mxu0 0.0
    %1909 = vmatprep.subr.mxu0 0.0
    %1910 = vmatpush1.msra.mxu0 0.0
    %1911 = vmatprep.subr.mxu0 0.0
    %1912 = vmatpush1.msra.mxu0 0.0
    %1913 = vmatprep.subr.mxu0 0.0
    %1914 = vmatpush1.msra.mxu0 0.0
    %1915 = vmatprep.subr.mxu0 0.0
    %1916 = vmatpush1.msra.mxu0 0.0
    %1917 = vmatprep.subr.mxu0 0.0
    %1918 = vmatpush1.msra.mxu0 0.0
    %1919 = vmatprep.subr.mxu0 0.0
    %1920 = vmatpush1.msra.mxu0 0.0
    %1921 = vmatprep.subr.mxu0 0.0
    %1922 = vmatpush1.msra.mxu0 0.0
    %1923 = vmatprep.subr.mxu0 0.0
    %1924 = vmatpush1.msra.mxu0 0.0
    %1925 = vmatprep.subr.mxu0 0.0
    %1926 = vmatpush1.msra.mxu0 0.0
    %1927 = vmatprep.subr.mxu0 0.0
    %1928 = vmatpush1.msra.mxu0 0.0
    %1929 = vmatprep.subr.mxu0 0.0
    %1930 = vmatpush1.msra.mxu0 0.0
    %1931 = vmatprep.subr.mxu0 0.0
    %1932 = vmatpush1.msra.mxu0 0.0
    %1933 = vmatprep.mubr.f32.mxu0 0.0
    %1934 = vmatmul.mubr.f32.gmra.mrb[0].mxu0 %v645
    %v1935 = vpop.f32.mrb[0].mxu0
    %v1936 = vadd.f32 0.0, %v1935
    %v1937 = vpop.f32.mrb[0].mxu0
    %1938 = vmatprep.mubr.f32.mxu0 0.0
    %1939 = vmatmul.mubr.f32.gmra.mrb[0].mxu0 %v646
    %v1940 = vpop.f32.mrb[0].mxu0
    %v1941 = vadd.f32 0.0, %v1940
    %v1942 = vpop.f32.mrb[0].mxu0
    %1943 = vmatprep.mubr.f32.mxu0 0.0
    %1944 = vmatmul.mubr.f32.gmra.mrb[0].mxu0 %v647
    %v1945 = vpop.f32.mrb[0].mxu0
    %v1946 = vadd.f32 0.0, %v1945
    %v1947 = vpop.f32.mrb[0].mxu0
    %1948 = vmatprep.mubr.f32.mxu0 0.0
    %1949 = vmatmul.mubr.f32.gmra.mrb[0].mxu0 %v648
    %v1950 = vpop.f32.mrb[0].mxu0
    %v1951 = vadd.f32 0.0, %v1950
    %v1952 = vpop.f32.mrb[0].mxu0
    %1953 = vmatprep.mubr.f32.mxu0 0.0
    %1954 = vmatmul.mubr.f32.gmra.mrb[0].mxu0 %v649
    %v1955 = vpop.f32.mrb[0].mxu0
    %v1956 = vadd.f32 0.0, %v1955
    %v1957 = vpop.f32.mrb[0].mxu0
    %1958 = vmatprep.mubr.f32.mxu0 0.0
    %1959 = vmatmul.mubr.f32.gmra.mrb[0].mxu0 %v650
    %v1960 = vpop.f32.mrb[0].mxu0
    %v1961 = vadd.f32 0.0, %v1960
    %v1962 = vpop.f32.mrb[0].mxu0
    %1963 = vmatprep.mubr.f32.mxu0 0.0
    %1964 = vmatmul.mubr.f32.gmra.mrb[0].mxu0 %v651
    %v1965 = vpop.f32.mrb[0].mxu0
    %v1966 = vadd.f32 0.0, %v1965
    %v1967 = vpop.f32.mrb[0].mxu0
    %1968 = vmatprep.mubr.f32.mxu0 0.0
    %1969 = vmatmul.mubr.f32.gmra.mrb[0].mxu0 %v652
    %v1970 = vpop.f32.mrb[0].mxu0
    %v1971 = vadd.f32 0.0, %v1970
    %v1972 = vpop.f32.mrb[0].mxu0
    %1973 = vmatprep.mubr.f32.mxu0 0.0
    %1974 = vmatmul.mubr.f32.gmra.mrb[0].mxu0 %v653
    %v1975 = vpop.f32.mrb[0].mxu0
    %v1976 = vadd.f32 0.0, %v1975
    %v1977 = vpop.f32.mrb[0].mxu0
    %1978 = vmatprep.mubr.f32.mxu0 0.0
    %1979 = vmatmul.mubr.f32.gmra.mrb[0].mxu0 %v654
    %v1980 = vpop.f32.mrb[0].mxu0
    %v1981 = vadd.f32 0.0, %v1980
    %v1982 = vpop.f32.mrb[0].mxu0
    %1983 = vmatprep.mubr.f32.mxu0 0.0
    %1984 = vmatmul.mubr.f32.gmra.mrb[0].mxu0 %v655
    %v1985 = vpop.f32.mrb[0].mxu0
    %v1986 = vadd.f32 0.0, %v1985
    %v1987 = vpop.f32.mrb[0].mxu0
    %1988 = vmatprep.mubr.f32.mxu0 0.0
    %1989 = vmatmul.mubr.f32.gmra.mrb[0].mxu0 %v656
    %v1990 = vpop.f32.mrb[0].mxu0
    %v1991 = vadd.f32 0.0, %v1990
    %v1992 = vpop.f32.mrb[0].mxu0
    %1993 = vmatprep.mubr.f32.mxu0 0.0
    %1994 = vmatmul.mubr.f32.gmra.mrb[0].mxu0 %v657
    %v1995 = vpop.f32.mrb[0].mxu0
    %v1996 = vadd.f32 0.0, %v1995
    %v1997 = vpop.f32.mrb[0].mxu0
    %1998 = vmatprep.mubr.f32.mxu0 0.0
    %1999 = vmatmul.mubr.f32.gmra.mrb[0].mxu0 %v658
    %v2000 = vpop.f32.mrb[0].mxu0
    %v2001 = vadd.f32 0.0, %v2000
    %v2002 = vpop.f32.mrb[0].mxu0
    %2003 = vmatprep.mubr.f32.mxu0 0.0
    %2004 = vmatmul.mubr.f32.gmra.mrb[0].mxu0 %v659
    %v2005 = vpop.f32.mrb[0].mxu0
    %v2006 = vadd.f32 0.0, %v2005
    %v2007 = vpop.f32.mrb[0].mxu0
    %2008 = vmatprep.mubr.f32.mxu0 0.0
    %2009 = vmatmul.mubr.f32.gmra.mrb[0].mxu0 %v660
    %v2010 = vpop.f32.mrb[0].mxu0
    %v2011 = vadd.f32 0.0, %v2010
    %v2012 = vpop.f32.mrb[0].mxu0
    %2013 = vdwg.mxu0
    %s2014 = scalar_lea.vmem %s6, 64
    %v2015 = vld [vmem:[%s2014] sm:$0xff]
    %v2016 = vld [vmem:[%s2014 + $0x8] sm:$0xff]
    %v2017 = vld [vmem:[%s2014 + $0x10] sm:$0xff]
    %v2018 = vld [vmem:[%s2014 + $0x18] sm:$0xff]
    %s2019 = scalar_lea.vmem %s7, 2
    %v2020 = vld [vmem:[%s2019] sm:$0x1]
    %v2022 = vlaneseq
    %v2023 = vshrl.u32 %v2022, 7
    %v2024 = vsub.s32 0, %v2023
    %v2025 = vrot.slane %v2020, %v2024
    %v2028 = vsel %vm435, %v1936, 0
    %v2031 = vsel %vm435, %v1941, 0
    %v2034 = vsel %vm435, %v1946, 0
    %v2037 = vsel %vm435, %v1951, 0
    %v2040 = vsel %vm435, %v1956, 0
    %v2043 = vsel %vm435, %v1961, 0
    %v2046 = vsel %vm435, %v1966, 0
    %v2049 = vsel %vm435, %v1971, 0
    %v2052 = vsel %vm435, %v1976, 0
    %v2055 = vsel %vm435, %v1981, 0
    %v2058 = vsel %vm435, %v1986, 0
    %v2061 = vsel %vm435, %v1991, 0
    %v2064 = vsel %vm435, %v1996, 0
    %v2067 = vsel %vm435, %v2001, 0
    %v2070 = vsel %vm435, %v2006, 0
    %v2073 = vsel %vm435, %v2011, 0
    %2075 = vmatprep.subr.mxu0 0.0
    %2076 = vmatpush1.msra.mxu0 %v2015
    %2077 = vmatprep.subr.mxu0 0.0
    %2078 = vmatpush1.msra.mxu0 %v2016
    %2079 = vmatprep.subr.mxu0 0.0
    %2080 = vmatpush1.msra.mxu0 %v2017
    %2081 = vmatprep.subr.mxu0 0.0
    %2082 = vmatpush1.msra.mxu0 %v2018
    %2083 = vmatprep.subr.mxu0 0.0
    %2084 = vmatpush1.msra.mxu0 0.0
    %2085 = vmatprep.subr.mxu0 0.0
    %2086 = vmatpush1.msra.mxu0 0.0
    %2087 = vmatprep.subr.mxu0 0.0
    %2088 = vmatpush1.msra.mxu0 0.0
    %2089 = vmatprep.subr.mxu0 0.0
    %2090 = vmatpush1.msra.mxu0 0.0
    %2091 = vmatprep.subr.mxu0 0.0
    %2092 = vmatpush1.msra.mxu0 0.0
    %2093 = vmatprep.subr.mxu0 0.0
    %2094 = vmatpush1.msra.mxu0 0.0
    %2095 = vmatprep.subr.mxu0 0.0
    %2096 = vmatpush1.msra.mxu0 0.0
    %2097 = vmatprep.subr.mxu0 0.0
    %2098 = vmatpush1.msra.mxu0 0.0
    %2099 = vmatprep.subr.mxu0 0.0
    %2100 = vmatpush1.msra.mxu0 0.0
    %2101 = vmatprep.subr.mxu0 0.0
    %2102 = vmatpush1.msra.mxu0 0.0
    %2103 = vmatprep.subr.mxu0 0.0
    %2104 = vmatpush1.msra.mxu0 0.0
    %2105 = vmatprep.subr.mxu0 0.0
    %2106 = vmatpush1.msra.mxu0 0.0
    %2107 = vmatprep.subr.mxu0 0.0
    %2108 = vmatpush1.msra.mxu0 0.0
    %2109 = vmatprep.subr.mxu0 0.0
    %2110 = vmatpush1.msra.mxu0 0.0
    %2111 = vmatprep.subr.mxu0 0.0
    %2112 = vmatpush1.msra.mxu0 0.0
    %2113 = vmatprep.subr.mxu0 0.0
    %2114 = vmatpush1.msra.mxu0 0.0
    %2115 = vmatprep.subr.mxu0 0.0
    %2116 = vmatpush1.msra.mxu0 0.0
    %2117 = vmatprep.subr.mxu0 0.0
    %2118 = vmatpush1.msra.mxu0 0.0
    %2119 = vmatprep.subr.mxu0 0.0
    %2120 = vmatpush1.msra.mxu0 0.0
    %2121 = vmatprep.subr.mxu0 0.0
    %2122 = vmatpush1.msra.mxu0 0.0
    %2123 = vmatprep.subr.mxu0 0.0
    %2124 = vmatpush1.msra.mxu0 0.0
    %2125 = vmatprep.subr.mxu0 0.0
    %2126 = vmatpush1.msra.mxu0 0.0
    %2127 = vmatprep.subr.mxu0 0.0
    %2128 = vmatpush1.msra.mxu0 0.0
    %2129 = vmatprep.subr.mxu0 0.0
    %2130 = vmatpush1.msra.mxu0 0.0
    %2131 = vmatprep.subr.mxu0 0.0
    %2132 = vmatpush1.msra.mxu0 0.0
    %2133 = vmatprep.subr.mxu0 0.0
    %2134 = vmatpush1.msra.mxu0 0.0
    %2135 = vmatprep.subr.mxu0 0.0
    %2136 = vmatpush1.msra.mxu0 0.0
    %2137 = vmatprep.subr.mxu0 0.0
    %2138 = vmatpush1.msra.mxu0 0.0
    %2139 = vmatprep.mubr.f32.mxu0 0.0
    %2140 = vmatmul.mubr.f32.gmra.mrb[0].mxu0 %v2028
    %v2141 = vpop.f32.mrb[0].mxu0
    %v2142 = vadd.f32 %v2025, %v2141
    %v2143 = vpop.f32.mrb[0].mxu0
    %2144 = vmatprep.mubr.f32.mxu0 0.0
    %2145 = vmatmul.mubr.f32.gmra.mrb[0].mxu0 %v2031
    %v2146 = vpop.f32.mrb[0].mxu0
    %v2147 = vadd.f32 %v2025, %v2146
    %v2148 = vpop.f32.mrb[0].mxu0
    %2149 = vmatprep.mubr.f32.mxu0 0.0
    %2150 = vmatmul.mubr.f32.gmra.mrb[0].mxu0 %v2034
    %v2151 = vpop.f32.mrb[0].mxu0
    %v2152 = vadd.f32 %v2025, %v2151
    %v2153 = vpop.f32.mrb[0].mxu0
    %2154 = vmatprep.mubr.f32.mxu0 0.0
    %2155 = vmatmul.mubr.f32.gmra.mrb[0].mxu0 %v2037
    %v2156 = vpop.f32.mrb[0].mxu0
    %v2157 = vadd.f32 %v2025, %v2156
    %v2158 = vpop.f32.mrb[0].mxu0
    %2159 = vmatprep.mubr.f32.mxu0 0.0
    %2160 = vmatmul.mubr.f32.gmra.mrb[0].mxu0 %v2040
    %v2161 = vpop.f32.mrb[0].mxu0
    %v2162 = vadd.f32 %v2025, %v2161
    %v2163 = vpop.f32.mrb[0].mxu0
    %2164 = vmatprep.mubr.f32.mxu0 0.0
    %2165 = vmatmul.mubr.f32.gmra.mrb[0].mxu0 %v2043
    %v2166 = vpop.f32.mrb[0].mxu0
    %v2167 = vadd.f32 %v2025, %v2166
    %v2168 = vpop.f32.mrb[0].mxu0
    %2169 = vmatprep.mubr.f32.mxu0 0.0
    %2170 = vmatmul.mubr.f32.gmra.mrb[0].mxu0 %v2046
    %v2171 = vpop.f32.mrb[0].mxu0
    %v2172 = vadd.f32 %v2025, %v2171
    %v2173 = vpop.f32.mrb[0].mxu0
    %2174 = vmatprep.mubr.f32.mxu0 0.0
    %2175 = vmatmul.mubr.f32.gmra.mrb[0].mxu0 %v2049
    %v2176 = vpop.f32.mrb[0].mxu0
    %v2177 = vadd.f32 %v2025, %v2176
    %v2178 = vpop.f32.mrb[0].mxu0
    %2179 = vmatprep.mubr.f32.mxu0 0.0
    %2180 = vmatmul.mubr.f32.gmra.mrb[0].mxu0 %v2052
    %v2181 = vpop.f32.mrb[0].mxu0
    %v2182 = vadd.f32 %v2025, %v2181
    %v2183 = vpop.f32.mrb[0].mxu0
    %2184 = vmatprep.mubr.f32.mxu0 0.0
    %2185 = vmatmul.mubr.f32.gmra.mrb[0].mxu0 %v2055
    %v2186 = vpop.f32.mrb[0].mxu0
    %v2187 = vadd.f32 %v2025, %v2186
    %v2188 = vpop.f32.mrb[0].mxu0
    %2189 = vmatprep.mubr.f32.mxu0 0.0
    %2190 = vmatmul.mubr.f32.gmra.mrb[0].mxu0 %v2058
    %v2191 = vpop.f32.mrb[0].mxu0
    %v2192 = vadd.f32 %v2025, %v2191
    %v2193 = vpop.f32.mrb[0].mxu0
    %2194 = vmatprep.mubr.f32.mxu0 0.0
    %2195 = vmatmul.mubr.f32.gmra.mrb[0].mxu0 %v2061
    %v2196 = vpop.f32.mrb[0].mxu0
    %v2197 = vadd.f32 %v2025, %v2196
    %v2198 = vpop.f32.mrb[0].mxu0
    %2199 = vmatprep.mubr.f32.mxu0 0.0
    %2200 = vmatmul.mubr.f32.gmra.mrb[0].mxu0 %v2064
    %v2201 = vpop.f32.mrb[0].mxu0
    %v2202 = vadd.f32 %v2025, %v2201
    %v2203 = vpop.f32.mrb[0].mxu0
    %2204 = vmatprep.mubr.f32.mxu0 0.0
    %2205 = vmatmul.mubr.f32.gmra.mrb[0].mxu0 %v2067
    %v2206 = vpop.f32.mrb[0].mxu0
    %v2207 = vadd.f32 %v2025, %v2206
    %v2208 = vpop.f32.mrb[0].mxu0
    %2209 = vmatprep.mubr.f32.mxu0 0.0
    %2210 = vmatmul.mubr.f32.gmra.mrb[0].mxu0 %v2070
    %v2211 = vpop.f32.mrb[0].mxu0
    %v2212 = vadd.f32 %v2025, %v2211
    %v2213 = vpop.f32.mrb[0].mxu0
    %2214 = vmatprep.mubr.f32.mxu0 0.0
    %2215 = vmatmul.mubr.f32.gmra.mrb[0].mxu0 %v2073
    %v2216 = vpop.f32.mrb[0].mxu0
    %v2217 = vadd.f32 %v2025, %v2216
    %v2218 = vpop.f32.mrb[0].mxu0
    %2219 = vdwg.mxu0
    %v2220 = vmax.f32 %v2142, 0.0
    %v2221 = vmax.f32 %v2147, 0.0
    %v2222 = vmax.f32 %v2152, 0.0
    %v2223 = vmax.f32 %v2157, 0.0
    %v2224 = vmax.f32 %v2162, 0.0
    %v2225 = vmax.f32 %v2167, 0.0
    %v2226 = vmax.f32 %v2172, 0.0
    %v2227 = vmax.f32 %v2177, 0.0
    %v2228 = vmax.f32 %v2182, 0.0
    %v2229 = vmax.f32 %v2187, 0.0
    %v2230 = vmax.f32 %v2192, 0.0
    %v2231 = vmax.f32 %v2197, 0.0
    %v2232 = vmax.f32 %v2202, 0.0
    %v2233 = vmax.f32 %v2207, 0.0
    %v2234 = vmax.f32 %v2212, 0.0
    %v2235 = vmax.f32 %v2217, 0.0
    %v2236 = vadd.f32 %v1631, %v2220
    %v2237 = vadd.f32 %v1632, %v2221
    %v2238 = vadd.f32 %v1633, %v2222
    %v2239 = vadd.f32 %v1634, %v2223
    %v2240 = vadd.f32 %v1635, %v2224
    %v2241 = vadd.f32 %v1636, %v2225
    %v2242 = vadd.f32 %v1637, %v2226
    %v2243 = vadd.f32 %v1638, %v2227
    %v2244 = vadd.f32 %v1639, %v2228
    %v2245 = vadd.f32 %v1640, %v2229
    %v2246 = vadd.f32 %v1641, %v2230
    %v2247 = vadd.f32 %v1642, %v2231
    %v2248 = vadd.f32 %v1643, %v2232
    %v2249 = vadd.f32 %v1644, %v2233
    %v2250 = vadd.f32 %v1645, %v2234
    %v2251 = vadd.f32 %v1646, %v2235
    %v2252 = vld [vmem:[%s0] sm:$0xff]
    %v2253 = vld [vmem:[%s0 + $0x8] sm:$0xff]
    %v2254 = vld [vmem:[%s0 + $0x10] sm:$0xff]
    %v2255 = vld [vmem:[%s0 + $0x18] sm:$0xff]
    %v2256 = vld [vmem:[%s0 + $0x20] sm:$0xff]
    %v2257 = vld [vmem:[%s0 + $0x28] sm:$0xff]
    %v2258 = vld [vmem:[%s0 + $0x30] sm:$0xff]
    %v2259 = vld [vmem:[%s0 + $0x38] sm:$0xff]
    %v2260 = vld [vmem:[%s0 + $0x40] sm:$0xff]
    %v2261 = vld [vmem:[%s0 + $0x48] sm:$0xff]
    %v2262 = vld [vmem:[%s0 + $0x50] sm:$0xff]
    %v2263 = vld [vmem:[%s0 + $0x58] sm:$0xff]
    %v2264 = vld [vmem:[%s0 + $0x60] sm:$0xff]
    %v2265 = vld [vmem:[%s0 + $0x68] sm:$0xff]
    %v2266 = vld [vmem:[%s0 + $0x70] sm:$0xff]
    %v2267 = vld [vmem:[%s0 + $0x78] sm:$0xff]
    %2269 = vset.pattern.permute.xlu0 8
    %2270 = vperm.xlu0 %2269, %v2252
    %v2271 = vpop.permute.xlu0 %2270
    %2274 = vset.pattern.permute.xlu0 8
    %2275 = vperm.xlu0 %2274, %v2253
    %v2276 = vpop.permute.xlu0 %2275
    %2279 = vset.pattern.permute.xlu0 8
    %2280 = vperm.xlu0 %2279, %v2254
    %v2281 = vpop.permute.xlu0 %2280
    %2284 = vset.pattern.permute.xlu0 8
    %2285 = vperm.xlu0 %2284, %v2255
    %v2286 = vpop.permute.xlu0 %2285
    %2289 = vset.pattern.permute.xlu0 8
    %2290 = vperm.xlu0 %2289, %v2256
    %v2291 = vpop.permute.xlu0 %2290
    %2294 = vset.pattern.permute.xlu0 8
    %2295 = vperm.xlu0 %2294, %v2257
    %v2296 = vpop.permute.xlu0 %2295
    %2299 = vset.pattern.permute.xlu0 8
    %2300 = vperm.xlu0 %2299, %v2258
    %v2301 = vpop.permute.xlu0 %2300
    %2304 = vset.pattern.permute.xlu0 8
    %2305 = vperm.xlu0 %2304, %v2259
    %v2306 = vpop.permute.xlu0 %2305
    %2309 = vset.pattern.permute.xlu0 8
    %2310 = vperm.xlu0 %2309, %v2260
    %v2311 = vpop.permute.xlu0 %2310
    %2314 = vset.pattern.permute.xlu0 8
    %2315 = vperm.xlu0 %2314, %v2261
    %v2316 = vpop.permute.xlu0 %2315
    %2319 = vset.pattern.permute.xlu0 8
    %2320 = vperm.xlu0 %2319, %v2262
    %v2321 = vpop.permute.xlu0 %2320
    %2324 = vset.pattern.permute.xlu0 8
    %2325 = vperm.xlu0 %2324, %v2263
    %v2326 = vpop.permute.xlu0 %2325
    %2329 = vset.pattern.permute.xlu0 8
    %2330 = vperm.xlu0 %2329, %v2264
    %v2331 = vpop.permute.xlu0 %2330
    %2334 = vset.pattern.permute.xlu0 8
    %2335 = vperm.xlu0 %2334, %v2265
    %v2336 = vpop.permute.xlu0 %2335
    %2339 = vset.pattern.permute.xlu0 8
    %2340 = vperm.xlu0 %2339, %v2266
    %v2341 = vpop.permute.xlu0 %2340
    %2344 = vset.pattern.permute.xlu0 8
    %2345 = vperm.xlu0 %2344, %v2267
    %v2346 = vpop.permute.xlu0 %2345
    %v2348 = vmul.f32 %v2236, %v2271
    %v2349 = vmul.f32 %v2237, %v2276
    %v2350 = vmul.f32 %v2238, %v2281
    %v2351 = vmul.f32 %v2239, %v2286
    %v2352 = vmul.f32 %v2240, %v2291
    %v2353 = vmul.f32 %v2241, %v2296
    %v2354 = vmul.f32 %v2242, %v2301
    %v2355 = vmul.f32 %v2243, %v2306
    %v2356 = vmul.f32 %v2244, %v2311
    %v2357 = vmul.f32 %v2245, %v2316
    %v2358 = vmul.f32 %v2246, %v2321
    %v2359 = vmul.f32 %v2247, %v2326
    %v2360 = vmul.f32 %v2248, %v2331
    %v2361 = vmul.f32 %v2249, %v2336
    %v2362 = vmul.f32 %v2250, %v2341
    %v2363 = vmul.f32 %v2251, %v2346
    %v2364 = vsel %vm435, %v2348, 0.0
    %v2365 = vrot.slane %v2364, 4
    %v2366 = vadd.f32 %v2364, %v2365
    %v2367 = vrot.slane %v2366, 2
    %v2368 = vadd.f32 %v2366, %v2367
    %v2369 = vrot.slane %v2368, 1
    %v2370 = vadd.f32 %v2368, %v2369
    %v2371 = vsel %vm435, %v2349, 0.0
    %v2372 = vrot.slane %v2371, 4
    %v2373 = vadd.f32 %v2371, %v2372
    %v2374 = vrot.slane %v2373, 2
    %v2375 = vadd.f32 %v2373, %v2374
    %v2376 = vrot.slane %v2375, 1
    %v2377 = vadd.f32 %v2375, %v2376
    %v2378 = vsel %vm435, %v2350, 0.0
    %v2379 = vrot.slane %v2378, 4
    %v2380 = vadd.f32 %v2378, %v2379
    %v2381 = vrot.slane %v2380, 2
    %v2382 = vadd.f32 %v2380, %v2381
    %v2383 = vrot.slane %v2382, 1
    %v2384 = vadd.f32 %v2382, %v2383
    %v2385 = vsel %vm435, %v2351, 0.0
    %v2386 = vrot.slane %v2385, 4
    %v2387 = vadd.f32 %v2385, %v2386
    %v2388 = vrot.slane %v2387, 2
    %v2389 = vadd.f32 %v2387, %v2388
    %v2390 = vrot.slane %v2389, 1
    %v2391 = vadd.f32 %v2389, %v2390
    %v2392 = vsel %vm435, %v2352, 0.0
    %v2393 = vrot.slane %v2392, 4
    %v2394 = vadd.f32 %v2392, %v2393
    %v2395 = vrot.slane %v2394, 2
    %v2396 = vadd.f32 %v2394, %v2395
    %v2397 = vrot.slane %v2396, 1
    %v2398 = vadd.f32 %v2396, %v2397
    %v2399 = vsel %vm435, %v2353, 0.0
    %v2400 = vrot.slane %v2399, 4
    %v2401 = vadd.f32 %v2399, %v2400
    %v2402 = vrot.slane %v2401, 2
    %v2403 = vadd.f32 %v2401, %v2402
    %v2404 = vrot.slane %v2403, 1
    %v2405 = vadd.f32 %v2403, %v2404
    %v2406 = vsel %vm435, %v2354, 0.0
    %v2407 = vrot.slane %v2406, 4
    %v2408 = vadd.f32 %v2406, %v2407
    %v2409 = vrot.slane %v2408, 2
    %v2410 = vadd.f32 %v2408, %v2409
    %v2411 = vrot.slane %v2410, 1
    %v2412 = vadd.f32 %v2410, %v2411
    %v2413 = vsel %vm435, %v2355, 0.0
    %v2414 = vrot.slane %v2413, 4
    %v2415 = vadd.f32 %v2413, %v2414
    %v2416 = vrot.slane %v2415, 2
    %v2417 = vadd.f32 %v2415, %v2416
    %v2418 = vrot.slane %v2417, 1
    %v2419 = vadd.f32 %v2417, %v2418
    %v2420 = vsel %vm435, %v2356, 0.0
    %v2421 = vrot.slane %v2420, 4
    %v2422 = vadd.f32 %v2420, %v2421
    %v2423 = vrot.slane %v2422, 2
    %v2424 = vadd.f32 %v2422, %v2423
    %v2425 = vrot.slane %v2424, 1
    %v2426 = vadd.f32 %v2424, %v2425
    %v2427 = vsel %vm435, %v2357, 0.0
    %v2428 = vrot.slane %v2427, 4
    %v2429 = vadd.f32 %v2427, %v2428
    %v2430 = vrot.slane %v2429, 2
    %v2431 = vadd.f32 %v2429, %v2430
    %v2432 = vrot.slane %v2431, 1
    %v2433 = vadd.f32 %v2431, %v2432
    %v2434 = vsel %vm435, %v2358, 0.0
    %v2435 = vrot.slane %v2434, 4
    %v2436 = vadd.f32 %v2434, %v2435
    %v2437 = vrot.slane %v2436, 2
    %v2438 = vadd.f32 %v2436, %v2437
    %v2439 = vrot.slane %v2438, 1
    %v2440 = vadd.f32 %v2438, %v2439
    %v2441 = vsel %vm435, %v2359, 0.0
    %v2442 = vrot.slane %v2441, 4
    %v2443 = vadd.f32 %v2441, %v2442
    %v2444 = vrot.slane %v2443, 2
    %v2445 = vadd.f32 %v2443, %v2444
    %v2446 = vrot.slane %v2445, 1
    %v2447 = vadd.f32 %v2445, %v2446
    %v2448 = vsel %vm435, %v2360, 0.0
    %v2449 = vrot.slane %v2448, 4
    %v2450 = vadd.f32 %v2448, %v2449
    %v2451 = vrot.slane %v2450, 2
    %v2452 = vadd.f32 %v2450, %v2451
    %v2453 = vrot.slane %v2452, 1
    %v2454 = vadd.f32 %v2452, %v2453
    %v2455 = vsel %vm435, %v2361, 0.0
    %v2456 = vrot.slane %v2455, 4
    %v2457 = vadd.f32 %v2455, %v2456
    %v2458 = vrot.slane %v2457, 2
    %v2459 = vadd.f32 %v2457, %v2458
    %v2460 = vrot.slane %v2459, 1
    %v2461 = vadd.f32 %v2459, %v2460
    %v2462 = vsel %vm435, %v2362, 0.0
    %v2463 = vrot.slane %v2462, 4
    %v2464 = vadd.f32 %v2462, %v2463
    %v2465 = vrot.slane %v2464, 2
    %v2466 = vadd.f32 %v2464, %v2465
    %v2467 = vrot.slane %v2466, 1
    %v2468 = vadd.f32 %v2466, %v2467
    %v2469 = vsel %vm435, %v2363, 0.0
    %v2470 = vrot.slane %v2469, 4
    %v2471 = vadd.f32 %v2469, %v2470
    %v2472 = vrot.slane %v2471, 2
    %v2473 = vadd.f32 %v2471, %v2472
    %v2474 = vrot.slane %v2473, 1
    %v2475 = vadd.f32 %v2473, %v2474
    %vm2492 = vcmask 1041409
    %v2493 = vsel %vm2492, %v2377, %v2370
    %vm2494 = vcmask 1042434
    %v2495 = vsel %vm2494, %v2384, %v2493
    %vm2496 = vcmask 1043459
    %v2497 = vsel %vm2496, %v2391, %v2495
    %vm2498 = vcmask 1044484
    %v2499 = vsel %vm2498, %v2398, %v2497
    %vm2500 = vcmask 1045509
    %v2501 = vsel %vm2500, %v2405, %v2499
    %vm2502 = vcmask 1046534
    %v2503 = vsel %vm2502, %v2412, %v2501
    %vm2504 = vcmask 1047559
    %v2505 = vsel %vm2504, %v2419, %v2503
    %v2506 = vsel %vm2492, %v2433, %v2426
    %v2507 = vsel %vm2494, %v2440, %v2506
    %v2508 = vsel %vm2496, %v2447, %v2507
    %v2509 = vsel %vm2498, %v2454, %v2508
    %v2510 = vsel %vm2500, %v2461, %v2509
    %v2511 = vsel %vm2502, %v2468, %v2510
    %v2512 = vsel %vm2504, %v2475, %v2511
    %2515 = vst.msk [vmem:[#allocation3] sm:$0xff] %vm435, %v2505
    %2516 = vst.msk [vmem:[#allocation3 + $0x8] sm:$0xff] %vm435, %v2512
    %vm2517 = vcmask 1047808
    %2518 = vst.msk [vmem:[#allocation3] sm:$0xff] %vm2517, 0.0
    %2519 = vst.msk [vmem:[#allocation3 + $0x8] sm:$0xff] %vm2517, 0.0
    // Predicated region
    $region34: #{gan_mpnn_forward.1} parent=1 // pred_check
      _
    $region35: #{gan_mpnn_forward.1} parent=1 // pred_check_branch
      %2521 = sbr.rel (0) target = $region37
    $region36: #{gan_mpnn_forward.1} parent=1 // pred_region
      %s2523 = ssub.s32 256, 256
      %2524 = vsyncadd [#allocation4], %s2523
      %s2525 = sshll.u32 [#allocation3], 4
      %s2526 = int_to_ptr.vmem [resolvable:$true] %s2525
      %2531 = dma.vmem_to_hbm [thread:$0]  %s2526, 256, %s8, [#allocation4], 128, 128, 8
    $region37: #{gan_mpnn_forward.1} parent=1 // pred_fallthru
      _
    // Predicated region
    $region38: #{gan_mpnn_forward.1} parent=1 // pred_check
      _
    $region39: #{gan_mpnn_forward.1} parent=1 // pred_check_branch
      %2533 = sbr.rel (0) target = $region41
    $region40: #{gan_mpnn_forward.1} parent=1 // pred_region
      %2534 = dma.done [#allocation4], 256
    $region41: #{gan_mpnn_forward.1} parent=1 // pred_fallthru
      _
    %2535 = vsyncpa [#allocation4], 1

</llo_original>
